<compile_context>
chip_gen: v7x
topology: tpu7x:2x2x1
jax: 0.10.0
libtpu: 0.0.40
codegen_flags: <defaults>
</compile_context>

<pallas_src>
import math

import jax
import jax.numpy as jnp
import numpy as np
from jax.experimental import pallas as pl
from jax.experimental.pallas import tpu as pltpu

# Static geometry implied by the PyTorch module (fc1 in_features = 16*6*6 = 576).
H_IN, W_IN, C_IN = 32, 32, 3
S1, C1 = 30, 8            # conv1 output: 30x30x8   (rows padded to 32)
S2, C2 = 13, 16           # conv2 output: 13x13x16  (rows padded to 16)
P2 = 6                    # pool2 output: 6x6x16
F1, F2, F3 = 120, 84, 10
LANE1 = 256               # conv1/pool1 lane width (240 valid, padded)
LANE2 = 256               # conv2/pool2 lane width (208 valid, padded)
NPAD = 128                # fc lane width / output lane width

_PARAM_ORDER = ("w1", "b1", "sel1", "w2", "b2", "sel2",
                "wf1", "bf1", "wf2", "bf2", "wf3", "bf3")


# ----------------------------- in-kernel helpers ---------------------------

def _shift_up(v, k):
    """rows i -> v[i+k]; zero fill at the bottom (values are >= 0 post-ReLU)."""
    return jnp.concatenate(
        [v[k:], jnp.zeros((k, v.shape[1]), v.dtype)], axis=0)


def _shift_left(v, k):
    """lanes l -> v[l+k]; zero fill on the right (invalid lanes never used)."""
    return jnp.concatenate(
        [v[:, k:], jnp.zeros((v.shape[0], k), v.dtype)], axis=1)


# --------------------------------- kernel ----------------------------------

def net_kernel(x_ref, w1_ref, b1_ref, s1_ref, w2_ref, b2_ref, s2_ref,
               wf1_ref, bf1_ref, wf2_ref, bf2_ref, wf3_ref, bf3_ref, o_ref):
    """B_TILE samples per grid step; all activations are 2-D (rows = batch*rows)."""
    f32, bf16 = jnp.float32, jnp.bfloat16
    B = o_ref.shape[0]            # B_TILE
    R2 = 16 * B                   # stacked conv2 rows

    # conv1 + bias + ReLU: ONE push, M = 32*B, K = 288, N = 256 (240 valid).
    a = jnp.dot(x_ref[...], w1_ref[...], preferred_element_type=f32)
    a = jnp.maximum(a + b1_ref[...], 0.0)                       # (32B, 256) f32

    # pool1 2x2 window maxima at every anchor (stride-2 pick folded into SEL1/w2).
    a = jnp.maximum(a, _shift_up(a, 1))
    a = jnp.maximum(a, _shift_left(a, C1))

    # pool1 row decimation + conv2 dy-row gather (block-diag 0/1 matmul), then
    # lane-concat the three dy copies -> conv2 LHS with K concatenated.
    q = jnp.dot(s1_ref[...], a.astype(bf16), preferred_element_type=f32)
    lhs = jnp.concatenate([q[0:R2], q[R2:2 * R2], q[2 * R2:3 * R2]], axis=1)

    # conv2 + bias + ReLU: ONE push, M = 16*B, K = 768, N = 256 (208 valid).
    a = jnp.dot(lhs.astype(bf16), w2_ref[...], preferred_element_type=f32)
    a = jnp.maximum(a + b2_ref[...], 0.0)                       # (16B, 256) f32

    # pool2 window maxima.
    a = jnp.maximum(a, _shift_up(a, 1))
    a = jnp.maximum(a, _shift_left(a, C2))

    # pool2 stride-2 row pick (6 rows / sample), lane-concat -> (B, 1536) fc1 LHS.
    q = jnp.dot(s2_ref[...], a.astype(bf16), preferred_element_type=f32)
    h = jnp.concatenate([q[i * B:(i + 1) * B] for i in range(P2)], axis=1)

    # fc1 / fc2 / fc3 (NCHW flatten + pool2 column pick folded into wf1).
    h = jnp.maximum(jnp.dot(h.astype(bf16), wf1_ref[...],
                            preferred_element_type=f32) + bf1_ref[...], 0.0)
    h = jnp.maximum(jnp.dot(h.astype(bf16), wf2_ref[...],
                            preferred_element_type=f32) + bf2_ref[...], 0.0)
    o_ref[...] = (jnp.dot(h.astype(bf16), wf3_ref[...],
                          preferred_element_type=f32) + bf3_ref[...])


# --------------------------------- wrapper ---------------------------------

def net_forward(x_nchw, kp):
    n = x_nchw.shape[0]
    b_tile = kp["sel2"].shape[0] // P2             # B_TILE baked into the SELs
    n_pad = ((n + b_tile - 1) // b_tile) * b_tile

    # NHWC, lanes packed as (w, cin); then the conv1 dy-band K-concat (layout
    # plumbing on the tiny input) and zero-pad rows 30,31 per sample.
    x = jnp.transpose(x_nchw, (0, 2, 3, 1)).reshape(n, H_IN, W_IN * C_IN)
    lhs = jnp.concatenate([x[:, 0:S1], x[:, 1:S1 + 1], x[:, 2:S1 + 2]], axis=2)
    lhs = jnp.pad(lhs, ((0, n_pad - n), (0, H_IN - S1), (0, 0)))
    lhs = lhs.reshape(n_pad * H_IN, 3 * W_IN * C_IN).astype(jnp.bfloat16)

    def full_spec(arr):
        return pl.BlockSpec(arr.shape, lambda i: (0, 0))

    ops = [kp[k] for k in _PARAM_ORDER]
    out = pl.pallas_call(
        net_kernel,
        out_shape=jax.ShapeDtypeStruct((n_pad, NPAD), jnp.float32),
        grid=(n_pad // b_tile,),
        in_specs=[pl.BlockSpec((b_tile * H_IN, 3 * W_IN * C_IN),
                               lambda i: (i, 0))]
                 + [full_spec(a) for a in ops],
        out_specs=pl.BlockSpec((b_tile, NPAD), lambda i: (i, 0)),
        compiler_params=pltpu.CompilerParams(
            dimension_semantics=("parallel",)),
    )(lhs, *ops)
    return out[:n, :F3]


# ----------------------------- parameter packing ---------------------------

def init_params(key):
    """Raw PyTorch-layout parameters (uniform(-1/sqrt(fan_in), +...))."""
    ks = jax.random.split(key, 10)

    def u(k, shape, fan_in):
        b = 1.0 / math.sqrt(fan_in)
        return jax.random.uniform(k, shape, jnp.float32, -b, b)

    return dict(
        conv1_w=u(ks[0], (8, 3, 3, 3), 27), conv1_b=u(ks[1], (8,), 27),
        conv2_w=u(ks[2], (16, 8, 3, 3), 72), conv2_b=u(ks[3], (16,), 72),
        fc1_w=u(ks[4], (F1, 576), 576), fc1_b=u(ks[5], (F1,), 576),
        fc2_w=u(ks[6], (F2, F1), F1), fc2_b=u(ks[7], (F2,), F1),
        fc3_w=u(ks[8], (F3, F2), F2), fc3_b=u(ks[9], (F3,), F2),
    )


def pack_params(raw, b_tile):
    """Fold im2col bands, pool decimation and the NCHW flatten into padded,
    K-concatenated bf16 weights; build block-diag SEL matrices for B_TILE."""
    B = b_tile
    w1 = np.asarray(raw["conv1_w"], np.float32)   # (8,3,3,3)  OIHW
    b1 = np.asarray(raw["conv1_b"], np.float32)
    w2 = np.asarray(raw["conv2_w"], np.float32)   # (16,8,3,3)
    b2 = np.asarray(raw["conv2_b"], np.float32)
    f1w = np.asarray(raw["fc1_w"], np.float32)
    f1b = np.asarray(raw["fc1_b"], np.float32)
    f2w = np.asarray(raw["fc2_w"], np.float32)
    f2b = np.asarray(raw["fc2_b"], np.float32)
    f3w = np.asarray(raw["fc3_w"], np.float32)
    f3b = np.asarray(raw["fc3_b"], np.float32)

    w1_hwio = np.transpose(w1, (2, 3, 1, 0))      # (3,3,3,8)   [dy,dx,cin,cout]
    w2_hwio = np.transpose(w2, (2, 3, 1, 0))      # (3,3,8,16)

    # conv1 K-concat band: K = dy*96 + w*3 + cin, N = wo*8 + c1 (240 -> 256).
    w1cat = np.zeros((3 * W_IN * C_IN, LANE1), np.float32)
    for dy in range(3):
        for wo in range(S1):
            for dx in range(3):
                w = wo + dx
                w1cat[dy * 96 + w * 3: dy * 96 + (w + 1) * 3,
                      wo * C1:(wo + 1) * C1] = w1_hwio[dy, dx]
    b1pad = np.zeros((1, LANE1), np.float32)
    b1pad[0, :S1 * C1] = np.tile(b1, S1)

    # SEL1: pool1 stride-2 row pick + conv2 dy row gather, block-diag over B.
    sel1 = np.zeros((3 * B * 16, B * 32), np.float32)
    for dy in range(3):
        for b in range(B):
            for i2 in range(S2):
                sel1[dy * B * 16 + b * 16 + i2, b * 32 + 2 * (i2 + dy)] = 1.0

    # conv2 K-concat band over the pool1 anchor lane space (col pick folded in):
    # K = dy*256 + (2*(j2+dx))*8 + cin, N = j2*16 + c2 (208 -> 256).
    w2cat = np.zeros((3 * LANE1, LANE2), np.float32)
    for dy in range(3):
        for j2 in range(S2):
            for dx in range(3):
                wc = 2 * (j2 + dx)
                w2cat[dy * LANE1 + wc * C1: dy * LANE1 + (wc + 1) * C1,
                      j2 * C2:(j2 + 1) * C2] = w2_hwio[dy, dx]
    b2pad = np.zeros((1, LANE2), np.float32)
    b2pad[0, :S2 * C2] = np.tile(b2, S2)

    # SEL2: pool2 stride-2 row pick; output row i*B + b = anchor row b*16 + 2i.
    sel2 = np.zeros((P2 * B, B * 16), np.float32)
    for i in range(P2):
        for b in range(B):
            sel2[i * B + b, b * 16 + 2 * i] = 1.0

    # fc1: PyTorch view(N,-1) on NCHW (k = c*36 + i*6 + j) + pool2 col pick
    # folded in; LHS lane = i*256 + (2j)*16 + c.
    wf1 = np.zeros((P2 * LANE2, NPAD), np.float32)
    for i in range(P2):
        for j in range(P2):
            for c in range(C2):
                k = c * (P2 * P2) + i * P2 + j
                wf1[i * LANE2 + (2 * j) * C2 + c, :F1] = f1w[:, k]
    bf1 = np.zeros((1, NPAD), np.float32); bf1[0, :F1] = f1b

    wf2 = np.zeros((NPAD, NPAD), np.float32); wf2[:F1, :F2] = f2w.T
    bf2 = np.zeros((1, NPAD), np.float32);    bf2[0, :F2] = f2b
    wf3 = np.zeros((NPAD, NPAD), np.float32); wf3[:F2, :F3] = f3w.T
    bf3 = np.zeros((1, NPAD), np.float32);    bf3[0, :F3] = f3b

    bf = jnp.bfloat16
    return {
        "w1": jnp.asarray(w1cat, bf), "b1": jnp.asarray(b1pad),
        "sel1": jnp.asarray(sel1, bf),
        "w2": jnp.asarray(w2cat, bf), "b2": jnp.asarray(b2pad),
        "sel2": jnp.asarray(sel2, bf),
        "wf1": jnp.asarray(wf1, bf), "bf1": jnp.asarray(bf1),
        "wf2": jnp.asarray(wf2, bf), "bf2": jnp.asarray(bf2),
        "wf3": jnp.asarray(wf3, bf), "bf3": jnp.asarray(bf3),
    }


# ----------------------------- pure-XLA reference ---------------------------

def reference_forward(x_nchw, raw):
    hp = jax.lax.Precision.HIGHEST
    y = jax.lax.conv_general_dilated(
        x_nchw, raw["conv1_w"], (1, 1), "VALID",
        dimension_numbers=("NCHW", "OIHW", "NCHW"), precision=hp)
    y = jax.nn.relu(y + raw["conv1_b"][None, :, None, None])
    y = jax.lax.reduce_window(y, -jnp.inf, jax.lax.max,
                              (1, 1, 2, 2), (1, 1, 2, 2), "VALID")
    y = jax.lax.conv_general_dilated(
        y, raw["conv2_w"], (1, 1), "VALID",
        dimension_numbers=("NCHW", "OIHW", "NCHW"), precision=hp)
    y = jax.nn.relu(y + raw["conv2_b"][None, :, None, None])
    y = jax.lax.reduce_window(y, -jnp.inf, jax.lax.max,
                              (1, 1, 2, 2), (1, 1, 2, 2), "VALID")
    y = y.reshape(y.shape[0], -1)
    y = jax.nn.relu(jnp.dot(y, raw["fc1_w"].T, precision=hp) + raw["fc1_b"])
    y = jax.nn.relu(jnp.dot(y, raw["fc2_w"].T, precision=hp) + raw["fc2_b"])
    return jnp.dot(y, raw["fc3_w"].T, precision=hp) + raw["fc3_b"]


# ----------------------------------- main -----------------------------------

if __name__ == "__main__":
    key = jax.random.PRNGKey(0)
    k_x, k_p = jax.random.split(key)
    # fc1 expects 576 = 16*6*6 features => 3-channel 32x32 input.
    x = jax.random.normal(k_x, (2, 3, H_IN, W_IN), dtype=jnp.float32)
    raw = init_params(k_p)

    n = x.shape[0]
    b_tile = n if n < 8 else 8        # batch tile (samples stacked on M axis)
    kp = pack_params(raw, b_tile)

    out = jax.jit(net_forward)(x, kp)
    out = jax.block_until_ready(out)

    assert out.shape == (2, 10), out.shape
    assert out.dtype == jnp.float32
    assert bool(jnp.all(jnp.isfinite(out)))

    ref = reference_forward(x, raw)
    max_err = float(jnp.max(jnp.abs(out - ref)))
    assert max_err < 5e-2, f"mismatch vs XLA reference: {max_err}"
    print("KERNEL_OK")
</pallas_src>

<mosaic_0001>
module attributes {stable_mosaic.version = 11 : i64} {
  func.func @net_kernel(%arg0: i32, %arg1: memref<64x288xbf16, #tpu.memory_space<vmem>>, %arg2: memref<288x256xbf16, #tpu.memory_space<vmem>>, %arg3: memref<1x256xf32, #tpu.memory_space<vmem>>, %arg4: memref<96x64xbf16, #tpu.memory_space<vmem>>, %arg5: memref<768x256xbf16, #tpu.memory_space<vmem>>, %arg6: memref<1x256xf32, #tpu.memory_space<vmem>>, %arg7: memref<12x32xbf16, #tpu.memory_space<vmem>>, %arg8: memref<1536x128xbf16, #tpu.memory_space<vmem>>, %arg9: memref<1x128xf32, #tpu.memory_space<vmem>>, %arg10: memref<128x128xbf16, #tpu.memory_space<vmem>>, %arg11: memref<1x128xf32, #tpu.memory_space<vmem>>, %arg12: memref<128x128xbf16, #tpu.memory_space<vmem>>, %arg13: memref<1x128xf32, #tpu.memory_space<vmem>>, %arg14: memref<2x128xf32, #tpu.memory_space<vmem>>) attributes {dimension_semantics = [#tpu.dimension_semantics<parallel>], iteration_bounds = array<i64: 1>, scalar_prefetch = 0 : i64, scratch_operands = 0 : i64, tpu.core_type = #tpu.core_type<tc>, window_params = [{transform_indices = @transform_0, window_bounds = array<i64: 64, 288>}, {pipeline_mode = #tpu.pipeline_mode<synchronous>, transform_indices = @transform_1, window_bounds = array<i64: 288, 256>}, {pipeline_mode = #tpu.pipeline_mode<synchronous>, transform_indices = @transform_2, window_bounds = array<i64: 1, 256>}, {pipeline_mode = #tpu.pipeline_mode<synchronous>, transform_indices = @transform_3, window_bounds = array<i64: 96, 64>}, {pipeline_mode = #tpu.pipeline_mode<synchronous>, transform_indices = @transform_4, window_bounds = array<i64: 768, 256>}, {pipeline_mode = #tpu.pipeline_mode<synchronous>, transform_indices = @transform_5, window_bounds = array<i64: 1, 256>}, {pipeline_mode = #tpu.pipeline_mode<synchronous>, transform_indices = @transform_6, window_bounds = array<i64: 12, 32>}, {pipeline_mode = #tpu.pipeline_mode<synchronous>, transform_indices = @transform_7, window_bounds = array<i64: 1536, 128>}, {pipeline_mode = #tpu.pipeline_mode<synchronous>, transform_indices = @transform_8, window_bounds = array<i64: 1, 128>}, {pipeline_mode = #tpu.pipeline_mode<synchronous>, transform_indices = @transform_9, window_bounds = array<i64: 128, 128>}, {pipeline_mode = #tpu.pipeline_mode<synchronous>, transform_indices = @transform_10, window_bounds = array<i64: 1, 128>}, {pipeline_mode = #tpu.pipeline_mode<synchronous>, transform_indices = @transform_11, window_bounds = array<i64: 128, 128>}, {pipeline_mode = #tpu.pipeline_mode<synchronous>, transform_indices = @transform_12, window_bounds = array<i64: 1, 128>}, {transform_indices = @transform_13, window_bounds = array<i64: 2, 128>}]} {
    %c0 = arith.constant 0 : index
    %c0_0 = arith.constant 0 : index
    %0 = vector.load %arg1[%c0, %c0_0] : memref<64x288xbf16, #tpu.memory_space<vmem>>, vector<64x288xbf16>
    %c0_1 = arith.constant 0 : index
    %c0_2 = arith.constant 0 : index
    %1 = vector.load %arg2[%c0_1, %c0_2] : memref<288x256xbf16, #tpu.memory_space<vmem>>, vector<288x256xbf16>
    %cst = arith.constant dense<0.000000e+00> : vector<64x256xf32>
    %2 = tpu.matmul %0, %1, %cst {dimension_numbers = #tpu.dot_dimension_numbers<[1], [0], [0], [1], [0, 0, 1, 1], [], []>} : vector<64x288xbf16>, vector<288x256xbf16>, vector<64x256xf32> -> vector<64x256xf32>
    %c0_3 = arith.constant 0 : index
    %c0_4 = arith.constant 0 : index
    %3 = vector.load %arg3[%c0_3, %c0_4] : memref<1x256xf32, #tpu.memory_space<vmem>>, vector<1x256xf32>
    %4 = vector.broadcast %3 : vector<1x256xf32> to vector<64x256xf32>
    %5 = arith.addf %2, %4 : vector<64x256xf32>
    %cst_5 = arith.constant 0.000000e+00 : f32
    %6 = vector.broadcast %cst_5 : f32 to vector<64x256xf32>
    %7 = arith.maximumf %5, %6 : vector<64x256xf32>
    %8 = vector.extract_strided_slice %7 {offsets = [1, 0], sizes = [63, 256], strides = [1, 1]} : vector<64x256xf32> to vector<63x256xf32>
    %cst_6 = arith.constant 0.000000e+00 : f32
    %9 = vector.broadcast %cst_6 : f32 to vector<1x256xf32>
    %10 = tpu.concatenate %8, %9 in 0 : vector<63x256xf32>, vector<1x256xf32> -> vector<64x256xf32>
    %11 = arith.maximumf %7, %10 : vector<64x256xf32>
    %12 = vector.extract_strided_slice %11 {offsets = [0, 8], sizes = [64, 248], strides = [1, 1]} : vector<64x256xf32> to vector<64x248xf32>
    %cst_7 = arith.constant 0.000000e+00 : f32
    %13 = vector.broadcast %cst_7 : f32 to vector<64x8xf32>
    %14 = tpu.concatenate %12, %13 in 1 : vector<64x248xf32>, vector<64x8xf32> -> vector<64x256xf32>
    %15 = arith.maximumf %11, %14 : vector<64x256xf32>
    %c0_8 = arith.constant 0 : index
    %c0_9 = arith.constant 0 : index
    %16 = vector.load %arg4[%c0_8, %c0_9] : memref<96x64xbf16, #tpu.memory_space<vmem>>, vector<96x64xbf16>
    %17 = arith.truncf %15 : vector<64x256xf32> to vector<64x256xbf16>
    %cst_10 = arith.constant dense<0.000000e+00> : vector<96x256xf32>
    %18 = tpu.matmul %16, %17, %cst_10 {dimension_numbers = #tpu.dot_dimension_numbers<[1], [0], [0], [1], [0, 0, 1, 1], [], []>} : vector<96x64xbf16>, vector<64x256xbf16>, vector<96x256xf32> -> vector<96x256xf32>
    %19 = vector.extract_strided_slice %18 {offsets = [0, 0], sizes = [32, 256], strides = [1, 1]} : vector<96x256xf32> to vector<32x256xf32>
    %20 = vector.extract_strided_slice %18 {offsets = [32, 0], sizes = [32, 256], strides = [1, 1]} : vector<96x256xf32> to vector<32x256xf32>
    %21 = vector.extract_strided_slice %18 {offsets = [64, 0], sizes = [32, 256], strides = [1, 1]} : vector<96x256xf32> to vector<32x256xf32>
    %22 = tpu.concatenate %19, %20, %21 in 1 : vector<32x256xf32>, vector<32x256xf32>, vector<32x256xf32> -> vector<32x768xf32>
    %23 = arith.truncf %22 : vector<32x768xf32> to vector<32x768xbf16>
    %c0_11 = arith.constant 0 : index
    %c0_12 = arith.constant 0 : index
    %24 = vector.load %arg5[%c0_11, %c0_12] : memref<768x256xbf16, #tpu.memory_space<vmem>>, vector<768x256xbf16>
    %cst_13 = arith.constant dense<0.000000e+00> : vector<32x256xf32>
    %25 = tpu.matmul %23, %24, %cst_13 {dimension_numbers = #tpu.dot_dimension_numbers<[1], [0], [0], [1], [0, 0, 1, 1], [], []>} : vector<32x768xbf16>, vector<768x256xbf16>, vector<32x256xf32> -> vector<32x256xf32>
    %c0_14 = arith.constant 0 : index
    %c0_15 = arith.constant 0 : index
    %26 = vector.load %arg6[%c0_14, %c0_15] : memref<1x256xf32, #tpu.memory_space<vmem>>, vector<1x256xf32>
    %27 = vector.broadcast %26 : vector<1x256xf32> to vector<32x256xf32>
    %28 = arith.addf %25, %27 : vector<32x256xf32>
    %cst_16 = arith.constant 0.000000e+00 : f32
    %29 = vector.broadcast %cst_16 : f32 to vector<32x256xf32>
    %30 = arith.maximumf %28, %29 : vector<32x256xf32>
    %31 = vector.extract_strided_slice %30 {offsets = [1, 0], sizes = [31, 256], strides = [1, 1]} : vector<32x256xf32> to vector<31x256xf32>
    %cst_17 = arith.constant 0.000000e+00 : f32
    %32 = vector.broadcast %cst_17 : f32 to vector<1x256xf32>
    %33 = tpu.concatenate %31, %32 in 0 : vector<31x256xf32>, vector<1x256xf32> -> vector<32x256xf32>
    %34 = arith.maximumf %30, %33 : vector<32x256xf32>
    %35 = vector.extract_strided_slice %34 {offsets = [0, 16], sizes = [32, 240], strides = [1, 1]} : vector<32x256xf32> to vector<32x240xf32>
    %cst_18 = arith.constant 0.000000e+00 : f32
    %36 = vector.broadcast %cst_18 : f32 to vector<32x16xf32>
    %37 = tpu.concatenate %35, %36 in 1 : vector<32x240xf32>, vector<32x16xf32> -> vector<32x256xf32>
    %38 = arith.maximumf %34, %37 : vector<32x256xf32>
    %c0_19 = arith.constant 0 : index
    %c0_20 = arith.constant 0 : index
    %39 = vector.load %arg7[%c0_19, %c0_20] : memref<12x32xbf16, #tpu.memory_space<vmem>>, vector<12x32xbf16>
    %40 = arith.truncf %38 : vector<32x256xf32> to vector<32x256xbf16>
    %cst_21 = arith.constant dense<0.000000e+00> : vector<12x256xf32>
    %41 = tpu.matmul %39, %40, %cst_21 {dimension_numbers = #tpu.dot_dimension_numbers<[1], [0], [0], [1], [0, 0, 1, 1], [], []>} : vector<12x32xbf16>, vector<32x256xbf16>, vector<12x256xf32> -> vector<12x256xf32>
    %42 = vector.extract_strided_slice %41 {offsets = [0, 0], sizes = [2, 256], strides = [1, 1]} : vector<12x256xf32> to vector<2x256xf32>
    %43 = vector.extract_strided_slice %41 {offsets = [2, 0], sizes = [2, 256], strides = [1, 1]} : vector<12x256xf32> to vector<2x256xf32>
    %44 = vector.extract_strided_slice %41 {offsets = [4, 0], sizes = [2, 256], strides = [1, 1]} : vector<12x256xf32> to vector<2x256xf32>
    %45 = vector.extract_strided_slice %41 {offsets = [6, 0], sizes = [2, 256], strides = [1, 1]} : vector<12x256xf32> to vector<2x256xf32>
    %46 = vector.extract_strided_slice %41 {offsets = [8, 0], sizes = [2, 256], strides = [1, 1]} : vector<12x256xf32> to vector<2x256xf32>
    %47 = vector.extract_strided_slice %41 {offsets = [10, 0], sizes = [2, 256], strides = [1, 1]} : vector<12x256xf32> to vector<2x256xf32>
    %48 = tpu.concatenate %42, %43, %44, %45, %46, %47 in 1 : vector<2x256xf32>, vector<2x256xf32>, vector<2x256xf32>, vector<2x256xf32>, vector<2x256xf32>, vector<2x256xf32> -> vector<2x1536xf32>
    %49 = arith.truncf %48 : vector<2x1536xf32> to vector<2x1536xbf16>
    %c0_22 = arith.constant 0 : index
    %c0_23 = arith.constant 0 : index
    %50 = vector.load %arg8[%c0_22, %c0_23] : memref<1536x128xbf16, #tpu.memory_space<vmem>>, vector<1536x128xbf16>
    %cst_24 = arith.constant dense<0.000000e+00> : vector<2x128xf32>
    %51 = tpu.matmul %49, %50, %cst_24 {dimension_numbers = #tpu.dot_dimension_numbers<[1], [0], [0], [1], [0, 0, 1, 1], [], []>} : vector<2x1536xbf16>, vector<1536x128xbf16>, vector<2x128xf32> -> vector<2x128xf32>
    %c0_25 = arith.constant 0 : index
    %c0_26 = arith.constant 0 : index
    %52 = vector.load %arg9[%c0_25, %c0_26] : memref<1x128xf32, #tpu.memory_space<vmem>>, vector<1x128xf32>
    %53 = vector.broadcast %52 : vector<1x128xf32> to vector<2x128xf32>
    %54 = arith.addf %51, %53 : vector<2x128xf32>
    %cst_27 = arith.constant 0.000000e+00 : f32
    %55 = vector.broadcast %cst_27 : f32 to vector<2x128xf32>
    %56 = arith.maximumf %54, %55 : vector<2x128xf32>
    %57 = arith.truncf %56 : vector<2x128xf32> to vector<2x128xbf16>
    %c0_28 = arith.constant 0 : index
    %c0_29 = arith.constant 0 : index
    %58 = vector.load %arg10[%c0_28, %c0_29] : memref<128x128xbf16, #tpu.memory_space<vmem>>, vector<128x128xbf16>
    %cst_30 = arith.constant dense<0.000000e+00> : vector<2x128xf32>
    %59 = tpu.matmul %57, %58, %cst_30 {dimension_numbers = #tpu.dot_dimension_numbers<[1], [0], [0], [1], [0, 0, 1, 1], [], []>} : vector<2x128xbf16>, vector<128x128xbf16>, vector<2x128xf32> -> vector<2x128xf32>
    %c0_31 = arith.constant 0 : index
    %c0_32 = arith.constant 0 : index
    %60 = vector.load %arg11[%c0_31, %c0_32] : memref<1x128xf32, #tpu.memory_space<vmem>>, vector<1x128xf32>
    %61 = vector.broadcast %60 : vector<1x128xf32> to vector<2x128xf32>
    %62 = arith.addf %59, %61 : vector<2x128xf32>
    %cst_33 = arith.constant 0.000000e+00 : f32
    %63 = vector.broadcast %cst_33 : f32 to vector<2x128xf32>
    %64 = arith.maximumf %62, %63 : vector<2x128xf32>
    %65 = arith.truncf %64 : vector<2x128xf32> to vector<2x128xbf16>
    %c0_34 = arith.constant 0 : index
    %c0_35 = arith.constant 0 : index
    %66 = vector.load %arg12[%c0_34, %c0_35] : memref<128x128xbf16, #tpu.memory_space<vmem>>, vector<128x128xbf16>
    %cst_36 = arith.constant dense<0.000000e+00> : vector<2x128xf32>
    %67 = tpu.matmul %65, %66, %cst_36 {dimension_numbers = #tpu.dot_dimension_numbers<[1], [0], [0], [1], [0, 0, 1, 1], [], []>} : vector<2x128xbf16>, vector<128x128xbf16>, vector<2x128xf32> -> vector<2x128xf32>
    %c0_37 = arith.constant 0 : index
    %c0_38 = arith.constant 0 : index
    %68 = vector.load %arg13[%c0_37, %c0_38] : memref<1x128xf32, #tpu.memory_space<vmem>>, vector<1x128xf32>
    %69 = vector.broadcast %68 : vector<1x128xf32> to vector<2x128xf32>
    %70 = arith.addf %67, %69 : vector<2x128xf32>
    %c0_39 = arith.constant 0 : index
    %c0_40 = arith.constant 0 : index
    %71 = vector.load %arg14[%c0_39, %c0_40] : memref<2x128xf32, #tpu.memory_space<vmem>>, vector<2x128xf32>
    tpu.vector_store %arg14[%c0_39, %c0_40], %70 {strides = array<i32>} : memref<2x128xf32, #tpu.memory_space<vmem>>, vector<2x128xf32>,
    return
  }
  func.func @transform_0(%arg0: i32) -> (i32, i32) {
    %c0_i32 = arith.constant 0 : i32
    %c0_i32_0 = arith.constant 0 : i32
    return %arg0, %c0_i32 : i32, i32
  }
  func.func @transform_1(%arg0: i32) -> (i32, i32) {
    %c0_i32 = arith.constant 0 : i32
    %c0_i32_0 = arith.constant 0 : i32
    %c0_i32_1 = arith.constant 0 : i32
    return %c0_i32, %c0_i32_0 : i32, i32
  }
  func.func @transform_2(%arg0: i32) -> (i32, i32) {
    %c0_i32 = arith.constant 0 : i32
    %c0_i32_0 = arith.constant 0 : i32
    %c0_i32_1 = arith.constant 0 : i32
    return %c0_i32, %c0_i32_0 : i32, i32
  }
  func.func @transform_3(%arg0: i32) -> (i32, i32) {
    %c0_i32 = arith.constant 0 : i32
    %c0_i32_0 = arith.constant 0 : i32
    %c0_i32_1 = arith.constant 0 : i32
    return %c0_i32, %c0_i32_0 : i32, i32
  }
  func.func @transform_4(%arg0: i32) -> (i32, i32) {
    %c0_i32 = arith.constant 0 : i32
    %c0_i32_0 = arith.constant 0 : i32
    %c0_i32_1 = arith.constant 0 : i32
    return %c0_i32, %c0_i32_0 : i32, i32
  }
  func.func @transform_5(%arg0: i32) -> (i32, i32) {
    %c0_i32 = arith.constant 0 : i32
    %c0_i32_0 = arith.constant 0 : i32
    %c0_i32_1 = arith.constant 0 : i32
    return %c0_i32, %c0_i32_0 : i32, i32
  }
  func.func @transform_6(%arg0: i32) -> (i32, i32) {
    %c0_i32 = arith.constant 0 : i32
    %c0_i32_0 = arith.constant 0 : i32
    %c0_i32_1 = arith.constant 0 : i32
    return %c0_i32, %c0_i32_0 : i32, i32
  }
  func.func @transform_7(%arg0: i32) -> (i32, i32) {
    %c0_i32 = arith.constant 0 : i32
    %c0_i32_0 = arith.constant 0 : i32
    %c0_i32_1 = arith.constant 0 : i32
    return %c0_i32, %c0_i32_0 : i32, i32
  }
  func.func @transform_8(%arg0: i32) -> (i32, i32) {
    %c0_i32 = arith.constant 0 : i32
    %c0_i32_0 = arith.constant 0 : i32
    %c0_i32_1 = arith.constant 0 : i32
    return %c0_i32, %c0_i32_0 : i32, i32
  }
  func.func @transform_9(%arg0: i32) -> (i32, i32) {
    %c0_i32 = arith.constant 0 : i32
    %c0_i32_0 = arith.constant 0 : i32
    %c0_i32_1 = arith.constant 0 : i32
    return %c0_i32, %c0_i32_0 : i32, i32
  }
  func.func @transform_10(%arg0: i32) -> (i32, i32) {
    %c0_i32 = arith.constant 0 : i32
    %c0_i32_0 = arith.constant 0 : i32
    %c0_i32_1 = arith.constant 0 : i32
    return %c0_i32, %c0_i32_0 : i32, i32
  }
  func.func @transform_11(%arg0: i32) -> (i32, i32) {
    %c0_i32 = arith.constant 0 : i32
    %c0_i32_0 = arith.constant 0 : i32
    %c0_i32_1 = arith.constant 0 : i32
    return %c0_i32, %c0_i32_0 : i32, i32
  }
  func.func @transform_12(%arg0: i32) -> (i32, i32) {
    %c0_i32 = arith.constant 0 : i32
    %c0_i32_0 = arith.constant 0 : i32
    %c0_i32_1 = arith.constant 0 : i32
    return %c0_i32, %c0_i32_0 : i32, i32
  }
  func.func @transform_13(%arg0: i32) -> (i32, i32) {
    %c0_i32 = arith.constant 0 : i32
    %c0_i32_0 = arith.constant 0 : i32
    return %arg0, %c0_i32 : i32, i32
  }
}

</mosaic_0001>

<llo_original>
// kernel: net_forward.1
$region0: #{net_forward.1}
  #allocation0 [shape = 'u32[]', space=smem, size = 0x4, offset = 0x4, fixed_abs, tag = 'smem constant byte address 0x4 - core index']
  #allocation1 [shape = 'u32[144,128]{1,0:T(1,128)}', space=vmem, size = 0x12000, scoped, tag = 'internal scratch']
  %s0 = inlined_call_operand.vmem [shape: bf16[64,288], index: 0, kind: input, shape index: {}]
  %s1 = inlined_call_operand.vmem [shape: bf16[288,256], index: 1, kind: input, shape index: {}]
  %s2 = inlined_call_operand.vmem [shape: f32[1,256], index: 2, kind: input, shape index: {}]
  %s3 = inlined_call_operand.vmem [shape: bf16[96,64], index: 3, kind: input, shape index: {}]
  %s4 = inlined_call_operand.vmem [shape: bf16[768,256], index: 4, kind: input, shape index: {}]
  %s5 = inlined_call_operand.vmem [shape: f32[1,256], index: 5, kind: input, shape index: {}]
  %s6 = inlined_call_operand.vmem [shape: bf16[12,32], index: 6, kind: input, shape index: {}]
  %s7 = inlined_call_operand.vmem [shape: bf16[1536,128], index: 7, kind: input, shape index: {}]
  %s8 = inlined_call_operand.vmem [shape: f32[1,128], index: 8, kind: input, shape index: {}]
  %s9 = inlined_call_operand.vmem [shape: bf16[128,128], index: 9, kind: input, shape index: {}]
  %s10 = inlined_call_operand.vmem [shape: f32[1,128], index: 10, kind: input, shape index: {}]
  %s11 = inlined_call_operand.vmem [shape: bf16[128,128], index: 11, kind: input, shape index: {}]
  %s12 = inlined_call_operand.vmem [shape: f32[1,128], index: 12, kind: input, shape index: {}]
  %s13 = inlined_call_operand.hbm [shape: f32[2,128], index: 13, kind: output, shape index: {}]
  %s14 = sld [smem:[#allocation0]]
  $region62: #{net_forward.1} parent=0
    _
  %s16 = ssub.s32 1, %s14
  %s17 = scalar_select 0, %s16, %s14
  $region1: #{net_forward.1} parent=0
    #allocation2 [shape = 'u8[1024]{0}', space=vmem, size = 0x400, scoped, tag = 'output window, operand 0, single buffered']
    #allocation3 [shape = 's32[1]{0}', space=sflag, size = 0x4, scoped, tag = 'scoped memory for net_forward.1']
    %18 = vsyncpa [#allocation3], 0
    // Predicated region
    $region2: #{net_forward.1} parent=1 // pred_check
      _
    $region3: #{net_forward.1} parent=1 // pred_check_branch
      %20 = sbr.rel (0) target = $region5
    $region4: #{net_forward.1} parent=1 // pred_region
      _
    $region5: #{net_forward.1} parent=1 // pred_fallthru
      _
    // Predicated region
    $region6: #{net_forward.1} parent=1 // pred_check
      _
    $region7: #{net_forward.1} parent=1 // pred_check_branch
      %22 = sbr.rel (0) target = $region9
    $region8: #{net_forward.1} parent=1 // pred_region
      _
    $region9: #{net_forward.1} parent=1 // pred_fallthru
      _
    // Predicated region
    $region10: #{net_forward.1} parent=1 // pred_check
      _
    $region11: #{net_forward.1} parent=1 // pred_check_branch
      %24 = sbr.rel (0) target = $region13
    $region12: #{net_forward.1} parent=1 // pred_region
      _
    $region13: #{net_forward.1} parent=1 // pred_fallthru
      _
    // Predicated region
    $region14: #{net_forward.1} parent=1 // pred_check
      _
    $region15: #{net_forward.1} parent=1 // pred_check_branch
      %26 = sbr.rel (0) target = $region17
    $region16: #{net_forward.1} parent=1 // pred_region
      _
    $region17: #{net_forward.1} parent=1 // pred_fallthru
      _
    // Predicated region
    $region18: #{net_forward.1} parent=1 // pred_check
      _
    $region19: #{net_forward.1} parent=1 // pred_check_branch
      %28 = sbr.rel (0) target = $region21
    $region20: #{net_forward.1} parent=1 // pred_region
      _
    $region21: #{net_forward.1} parent=1 // pred_fallthru
      _
    // Predicated region
    $region22: #{net_forward.1} parent=1 // pred_check
      _
    $region23: #{net_forward.1} parent=1 // pred_check_branch
      %30 = sbr.rel (0) target = $region25
    $region24: #{net_forward.1} parent=1 // pred_region
      _
    $region25: #{net_forward.1} parent=1 // pred_fallthru
      _
    // Predicated region
    $region26: #{net_forward.1} parent=1 // pred_check
      _
    $region27: #{net_forward.1} parent=1 // pred_check_branch
      %32 = sbr.rel (0) target = $region29
    $region28: #{net_forward.1} parent=1 // pred_region
      _
    $region29: #{net_forward.1} parent=1 // pred_fallthru
      _
    // Predicated region
    $region30: #{net_forward.1} parent=1 // pred_check
      _
    $region31: #{net_forward.1} parent=1 // pred_check_branch
      %34 = sbr.rel (0) target = $region33
    $region32: #{net_forward.1} parent=1 // pred_region
      _
    $region33: #{net_forward.1} parent=1 // pred_fallthru
      _
    // Predicated region
    $region34: #{net_forward.1} parent=1 // pred_check
      _
    $region35: #{net_forward.1} parent=1 // pred_check_branch
      %36 = sbr.rel (0) target = $region37
    $region36: #{net_forward.1} parent=1 // pred_region
      _
    $region37: #{net_forward.1} parent=1 // pred_fallthru
      _
    // Predicated region
    $region38: #{net_forward.1} parent=1 // pred_check
      _
    $region39: #{net_forward.1} parent=1 // pred_check_branch
      %38 = sbr.rel (0) target = $region41
    $region40: #{net_forward.1} parent=1 // pred_region
      _
    $region41: #{net_forward.1} parent=1 // pred_fallthru
      _
    // Predicated region
    $region42: #{net_forward.1} parent=1 // pred_check
      _
    $region43: #{net_forward.1} parent=1 // pred_check_branch
      %40 = sbr.rel (0) target = $region45
    $region44: #{net_forward.1} parent=1 // pred_region
      _
    $region45: #{net_forward.1} parent=1 // pred_fallthru
      _
    // Predicated region
    $region46: #{net_forward.1} parent=1 // pred_check
      _
    $region47: #{net_forward.1} parent=1 // pred_check_branch
      %42 = sbr.rel (0) target = $region49
    $region48: #{net_forward.1} parent=1 // pred_region
      _
    $region49: #{net_forward.1} parent=1 // pred_fallthru
      _
    // Predicated region
    $region50: #{net_forward.1} parent=1 // pred_check
      _
    $region51: #{net_forward.1} parent=1 // pred_check_branch
      %44 = sbr.rel (0) target = $region53
    $region52: #{net_forward.1} parent=1 // pred_region
      _
    $region53: #{net_forward.1} parent=1 // pred_fallthru
      _
    %v46 = vld [vmem:[%s0] sm:$0xff]
    %v47 = vld [vmem:[%s0 + $0x8] sm:$0xf]
    %v48 = vld [vmem:[%s0 + $0xc] sm:$0xff]
    %v49 = vld [vmem:[%s0 + $0x14] sm:$0xf]
    %v50 = vld [vmem:[%s0 + $0x18] sm:$0xff]
    %v51 = vld [vmem:[%s0 + $0x20] sm:$0xf]
    %v52 = vld [vmem:[%s0 + $0x24] sm:$0xff]
    %v53 = vld [vmem:[%s0 + $0x2c] sm:$0xf]
    %v54 = vld [vmem:[%s0 + $0x30] sm:$0xff]
    %v55 = vld [vmem:[%s0 + $0x38] sm:$0xf]
    %v56 = vld [vmem:[%s0 + $0x3c] sm:$0xff]
    %v57 = vld [vmem:[%s0 + $0x44] sm:$0xf]
    %v58 = vld [vmem:[%s0 + $0x48] sm:$0xff]
    %v59 = vld [vmem:[%s0 + $0x50] sm:$0xf]
    %v60 = vld [vmem:[%s0 + $0x54] sm:$0xff]
    %v61 = vld [vmem:[%s0 + $0x5c] sm:$0xf]
    %v62 = vld [vmem:[%s1] sm:$0xff]
    %v63 = vld [vmem:[%s1 + $0x8] sm:$0xff]
    %v64 = vld [vmem:[%s1 + $0x10] sm:$0xff]
    %v65 = vld [vmem:[%s1 + $0x18] sm:$0xff]
    %v66 = vld [vmem:[%s1 + $0x20] sm:$0xff]
    %v67 = vld [vmem:[%s1 + $0x28] sm:$0xff]
    %v68 = vld [vmem:[%s1 + $0x30] sm:$0xff]
    %v69 = vld [vmem:[%s1 + $0x38] sm:$0xff]
    %v70 = vld [vmem:[%s1 + $0x40] sm:$0xff]
    %v71 = vld [vmem:[%s1 + $0x48] sm:$0xff]
    %v72 = vld [vmem:[%s1 + $0x50] sm:$0xff]
    %v73 = vld [vmem:[%s1 + $0x58] sm:$0xff]
    %v74 = vld [vmem:[%s1 + $0x60] sm:$0xff]
    %v75 = vld [vmem:[%s1 + $0x68] sm:$0xff]
    %v76 = vld [vmem:[%s1 + $0x70] sm:$0xff]
    %v77 = vld [vmem:[%s1 + $0x78] sm:$0xff]
    %v78 = vld [vmem:[%s1 + $0x80] sm:$0xff]
    %v79 = vld [vmem:[%s1 + $0x88] sm:$0xff]
    %v80 = vld [vmem:[%s1 + $0x90] sm:$0xff]
    %v81 = vld [vmem:[%s1 + $0x98] sm:$0xff]
    %v82 = vld [vmem:[%s1 + $0xa0] sm:$0xff]
    %v83 = vld [vmem:[%s1 + $0xa8] sm:$0xff]
    %v84 = vld [vmem:[%s1 + $0xb0] sm:$0xff]
    %v85 = vld [vmem:[%s1 + $0xb8] sm:$0xff]
    %v86 = vld [vmem:[%s1 + $0xc0] sm:$0xff]
    %v87 = vld [vmem:[%s1 + $0xc8] sm:$0xff]
    %v88 = vld [vmem:[%s1 + $0xd0] sm:$0xff]
    %v89 = vld [vmem:[%s1 + $0xd8] sm:$0xff]
    %v90 = vld [vmem:[%s1 + $0xe0] sm:$0xff]
    %v91 = vld [vmem:[%s1 + $0xe8] sm:$0xff]
    %v92 = vld [vmem:[%s1 + $0xf0] sm:$0xff]
    %v93 = vld [vmem:[%s1 + $0xf8] sm:$0xff]
    %v94 = vld [vmem:[%s1 + $0x100] sm:$0xff]
    %v95 = vld [vmem:[%s1 + $0x108] sm:$0xff]
    %v96 = vld [vmem:[%s1 + $0x110] sm:$0xff]
    %v97 = vld [vmem:[%s1 + $0x118] sm:$0xff]
    %v98 = vld [vmem:[%s2] sm:$0x3]
    %v100 = vlaneseq
    %v101 = vshrl.u32 %v100, 7
    %v102 = vsub.s32 0, %v101
    %v103 = vrot.slane %v98, %v102
    %v104 = vlaneseq
    %v105 = vshrl.u32 %v104, 7
    %v106 = vsub.s32 1, %v105
    %v107 = vrot.slane %v98, %v106
    %v126 = vunpack.c.l.b16 %v46
    %v127 = vunpack.c.h.b16 %v46
    %v128 = vunpack.c.l.b16 %v47
    %v129 = vunpack.c.l.b16 %v48
    %v130 = vunpack.c.h.b16 %v48
    %v131 = vunpack.c.l.b16 %v49
    %v132 = vunpack.c.l.b16 %v50
    %v133 = vunpack.c.h.b16 %v50
    %v134 = vunpack.c.l.b16 %v51
    %v135 = vunpack.c.l.b16 %v52
    %v136 = vunpack.c.h.b16 %v52
    %v137 = vunpack.c.l.b16 %v53
    %v138 = vunpack.c.l.b16 %v54
    %v139 = vunpack.c.h.b16 %v54
    %v140 = vunpack.c.l.b16 %v55
    %v141 = vunpack.c.l.b16 %v56
    %v142 = vunpack.c.h.b16 %v56
    %v143 = vunpack.c.l.b16 %v57
    %v144 = vunpack.c.l.b16 %v58
    %v145 = vunpack.c.h.b16 %v58
    %v146 = vunpack.c.l.b16 %v59
    %v147 = vunpack.c.l.b16 %v60
    %v148 = vunpack.c.h.b16 %v60
    %v149 = vunpack.c.l.b16 %v61
    %v150 = vpack.c.b16 %v129, %v126
    %v151 = vpack.c.b16 %v130, %v127
    %v152 = vpack.c.b16 %v131, %v128
    %v153 = vpack.c.b16 %v135, %v132
    %v154 = vpack.c.b16 %v136, %v133
    %v155 = vpack.c.b16 %v137, %v134
    %v156 = vpack.c.b16 %v141, %v138
    %v157 = vpack.c.b16 %v142, %v139
    %v158 = vpack.c.b16 %v143, %v140
    %v159 = vpack.c.b16 %v147, %v144
    %v160 = vpack.c.b16 %v148, %v145
    %v161 = vpack.c.b16 %v149, %v146
    %v206 = vunpack.c.l.b16 %v62
    %v207 = vunpack.c.h.b16 %v62
    %v208 = vunpack.c.l.b16 %v63
    %v209 = vunpack.c.h.b16 %v63
    %v210 = vunpack.c.l.b16 %v64
    %v211 = vunpack.c.h.b16 %v64
    %v212 = vunpack.c.l.b16 %v65
    %v213 = vunpack.c.h.b16 %v65
    %v214 = vunpack.c.l.b16 %v66
    %v215 = vunpack.c.h.b16 %v66
    %v216 = vunpack.c.l.b16 %v67
    %v217 = vunpack.c.h.b16 %v67
    %v218 = vunpack.c.l.b16 %v68
    %v219 = vunpack.c.h.b16 %v68
    %v220 = vunpack.c.l.b16 %v69
    %v221 = vunpack.c.h.b16 %v69
    %v222 = vunpack.c.l.b16 %v70
    %v223 = vunpack.c.h.b16 %v70
    %v224 = vunpack.c.l.b16 %v71
    %v225 = vunpack.c.h.b16 %v71
    %v226 = vunpack.c.l.b16 %v72
    %v227 = vunpack.c.h.b16 %v72
    %v228 = vunpack.c.l.b16 %v73
    %v229 = vunpack.c.h.b16 %v73
    %v230 = vunpack.c.l.b16 %v74
    %v231 = vunpack.c.h.b16 %v74
    %v232 = vunpack.c.l.b16 %v75
    %v233 = vunpack.c.h.b16 %v75
    %v234 = vunpack.c.l.b16 %v76
    %v235 = vunpack.c.h.b16 %v76
    %v236 = vunpack.c.l.b16 %v77
    %v237 = vunpack.c.h.b16 %v77
    %v238 = vunpack.c.l.b16 %v78
    %v239 = vunpack.c.h.b16 %v78
    %v240 = vunpack.c.l.b16 %v79
    %v241 = vunpack.c.h.b16 %v79
    %v242 = vunpack.c.l.b16 %v80
    %v243 = vunpack.c.h.b16 %v80
    %v244 = vunpack.c.l.b16 %v81
    %v245 = vunpack.c.h.b16 %v81
    %v246 = vunpack.c.l.b16 %v82
    %v247 = vunpack.c.h.b16 %v82
    %v248 = vunpack.c.l.b16 %v83
    %v249 = vunpack.c.h.b16 %v83
    %v250 = vunpack.c.l.b16 %v84
    %v251 = vunpack.c.h.b16 %v84
    %v252 = vunpack.c.l.b16 %v85
    %v253 = vunpack.c.h.b16 %v85
    %v254 = vunpack.c.l.b16 %v86
    %v255 = vunpack.c.h.b16 %v86
    %v256 = vunpack.c.l.b16 %v87
    %v257 = vunpack.c.h.b16 %v87
    %v258 = vunpack.c.l.b16 %v88
    %v259 = vunpack.c.h.b16 %v88
    %v260 = vunpack.c.l.b16 %v89
    %v261 = vunpack.c.h.b16 %v89
    %v262 = vunpack.c.l.b16 %v90
    %v263 = vunpack.c.h.b16 %v90
    %v264 = vunpack.c.l.b16 %v91
    %v265 = vunpack.c.h.b16 %v91
    %v266 = vunpack.c.l.b16 %v92
    %v267 = vunpack.c.h.b16 %v92
    %v268 = vunpack.c.l.b16 %v93
    %v269 = vunpack.c.h.b16 %v93
    %v270 = vunpack.c.l.b16 %v94
    %v271 = vunpack.c.h.b16 %v94
    %v272 = vunpack.c.l.b16 %v95
    %v273 = vunpack.c.h.b16 %v95
    %v274 = vunpack.c.l.b16 %v96
    %v275 = vunpack.c.h.b16 %v96
    %v276 = vunpack.c.l.b16 %v97
    %v277 = vunpack.c.h.b16 %v97
    %v278 = vpack.c.b16 %v208, %v206
    %v279 = vpack.c.b16 %v209, %v207
    %v280 = vpack.c.b16 %v212, %v210
    %v281 = vpack.c.b16 %v213, %v211
    %v282 = vpack.c.b16 %v216, %v214
    %v283 = vpack.c.b16 %v217, %v215
    %v284 = vpack.c.b16 %v220, %v218
    %v285 = vpack.c.b16 %v221, %v219
    %v286 = vpack.c.b16 %v224, %v222
    %v287 = vpack.c.b16 %v225, %v223
    %v288 = vpack.c.b16 %v228, %v226
    %v289 = vpack.c.b16 %v229, %v227
    %v290 = vpack.c.b16 %v232, %v230
    %v291 = vpack.c.b16 %v233, %v231
    %v292 = vpack.c.b16 %v236, %v234
    %v293 = vpack.c.b16 %v237, %v235
    %v294 = vpack.c.b16 %v240, %v238
    %v295 = vpack.c.b16 %v241, %v239
    %v296 = vpack.c.b16 %v244, %v242
    %v297 = vpack.c.b16 %v245, %v243
    %v298 = vpack.c.b16 %v248, %v246
    %v299 = vpack.c.b16 %v249, %v247
    %v300 = vpack.c.b16 %v252, %v250
    %v301 = vpack.c.b16 %v253, %v251
    %v302 = vpack.c.b16 %v256, %v254
    %v303 = vpack.c.b16 %v257, %v255
    %v304 = vpack.c.b16 %v260, %v258
    %v305 = vpack.c.b16 %v261, %v259
    %v306 = vpack.c.b16 %v264, %v262
    %v307 = vpack.c.b16 %v265, %v263
    %v308 = vpack.c.b16 %v268, %v266
    %v309 = vpack.c.b16 %v269, %v267
    %v310 = vpack.c.b16 %v272, %v270
    %v311 = vpack.c.b16 %v273, %v271
    %v312 = vpack.c.b16 %v276, %v274
    %v313 = vpack.c.b16 %v277, %v275
    %vm350 = vcmask 261120
    %v352 = vsel %vm350, %v152, 0
    %v355 = vsel %vm350, %v155, 0
    %v358 = vsel %vm350, %v158, 0
    %v361 = vsel %vm350, %v161, 0
    %363 = vmatprep.subr.bf16.mxu0 %v279
    %364 = vmatpush1.bf16.msra.mxu0 %v278
    %365 = vmatprep.subr.bf16.mxu0 %v281
    %366 = vmatpush1.bf16.msra.mxu0 %v280
    %367 = vmatprep.subr.bf16.mxu0 %v283
    %368 = vmatpush1.bf16.msra.mxu0 %v282
    %369 = vmatprep.subr.bf16.mxu0 %v285
    %370 = vmatpush1.bf16.msra.mxu0 %v284
    %371 = vmatprep.subr.bf16.mxu0 %v287
    %372 = vmatpush1.bf16.msra.mxu0 %v286
    %373 = vmatprep.subr.bf16.mxu0 %v289
    %374 = vmatpush1.bf16.msra.mxu0 %v288
    %375 = vmatprep.subr.bf16.mxu0 %v291
    %376 = vmatpush1.bf16.msra.mxu0 %v290
    %377 = vmatprep.subr.bf16.mxu0 %v293
    %378 = vmatpush1.bf16.msra.mxu0 %v292
    %379 = vmatprep.subr.bf16.mxu0 %v295
    %380 = vmatpush1.bf16.msra.mxu0 %v294
    %381 = vmatprep.subr.bf16.mxu0 %v297
    %382 = vmatpush1.bf16.msra.mxu0 %v296
    %383 = vmatprep.subr.bf16.mxu0 %v299
    %384 = vmatpush1.bf16.msra.mxu0 %v298
    %385 = vmatprep.subr.bf16.mxu0 %v301
    %386 = vmatpush1.bf16.msra.mxu0 %v300
    %387 = vmatprep.subr.bf16.mxu0 %v303
    %388 = vmatpush1.bf16.msra.mxu0 %v302
    %389 = vmatprep.subr.bf16.mxu0 %v305
    %390 = vmatpush1.bf16.msra.mxu0 %v304
    %391 = vmatprep.subr.bf16.mxu0 %v307
    %392 = vmatpush1.bf16.msra.mxu0 %v306
    %393 = vmatprep.subr.bf16.mxu0 %v309
    %394 = vmatpush1.bf16.msra.mxu0 %v308
    %395 = vmatprep.mubr.bf16.mxu0 %v151
    %396 = vmatmul.mubr.bf16.gmra.mrb[0].mxu0 %v150
    %v397 = vpop.f32.mrb[0].mxu0
    %v398 = vadd.f32 %v103, %v397
    %v399 = vpop.f32.mrb[0].mxu0
    %v400 = vadd.f32 %v107, %v399
    %v401 = vpop.f32.mrb[0].mxu0
    %v402 = vadd.f32 %v103, %v401
    %v403 = vpop.f32.mrb[0].mxu0
    %v404 = vadd.f32 %v107, %v403
    %405 = vmatprep.mubr.bf16.mxu0 %v154
    %406 = vmatmul.mubr.bf16.gmra.mrb[0].mxu0 %v153
    %v407 = vpop.f32.mrb[0].mxu0
    %v408 = vadd.f32 %v103, %v407
    %v409 = vpop.f32.mrb[0].mxu0
    %v410 = vadd.f32 %v107, %v409
    %v411 = vpop.f32.mrb[0].mxu0
    %v412 = vadd.f32 %v103, %v411
    %v413 = vpop.f32.mrb[0].mxu0
    %v414 = vadd.f32 %v107, %v413
    %415 = vmatprep.mubr.bf16.mxu0 %v157
    %416 = vmatmul.mubr.bf16.gmra.mrb[0].mxu0 %v156
    %v417 = vpop.f32.mrb[0].mxu0
    %v418 = vadd.f32 %v103, %v417
    %v419 = vpop.f32.mrb[0].mxu0
    %v420 = vadd.f32 %v107, %v419
    %v421 = vpop.f32.mrb[0].mxu0
    %v422 = vadd.f32 %v103, %v421
    %v423 = vpop.f32.mrb[0].mxu0
    %v424 = vadd.f32 %v107, %v423
    %425 = vmatprep.mubr.bf16.mxu0 %v160
    %426 = vmatmul.mubr.bf16.gmra.mrb[0].mxu0 %v159
    %v427 = vpop.f32.mrb[0].mxu0
    %v428 = vadd.f32 %v103, %v427
    %v429 = vpop.f32.mrb[0].mxu0
    %v430 = vadd.f32 %v107, %v429
    %v431 = vpop.f32.mrb[0].mxu0
    %v432 = vadd.f32 %v103, %v431
    %v433 = vpop.f32.mrb[0].mxu0
    %v434 = vadd.f32 %v107, %v433
    %435 = vdwg.mxu0
    %436 = vmatprep.subr.bf16.mxu0 %v311
    %437 = vmatpush1.bf16.msra.mxu0 %v310
    %438 = vmatprep.subr.bf16.mxu0 %v313
    %439 = vmatpush1.bf16.msra.mxu0 %v312
    %440 = vmatprep.subr.bf16.mxu0 0
    %441 = vmatpush1.bf16.msra.mxu0 0
    %442 = vmatprep.subr.bf16.mxu0 0
    %443 = vmatpush1.bf16.msra.mxu0 0
    %444 = vmatprep.subr.bf16.mxu0 0
    %445 = vmatpush1.bf16.msra.mxu0 0
    %446 = vmatprep.subr.bf16.mxu0 0
    %447 = vmatpush1.bf16.msra.mxu0 0
    %448 = vmatprep.subr.bf16.mxu0 0
    %449 = vmatpush1.bf16.msra.mxu0 0
    %450 = vmatprep.subr.bf16.mxu0 0
    %451 = vmatpush1.bf16.msra.mxu0 0
    %452 = vmatprep.subr.bf16.mxu0 0
    %453 = vmatpush1.bf16.msra.mxu0 0
    %454 = vmatprep.subr.bf16.mxu0 0
    %455 = vmatpush1.bf16.msra.mxu0 0
    %456 = vmatprep.subr.bf16.mxu0 0
    %457 = vmatpush1.bf16.msra.mxu0 0
    %458 = vmatprep.subr.bf16.mxu0 0
    %459 = vmatpush1.bf16.msra.mxu0 0
    %460 = vmatprep.subr.bf16.mxu0 0
    %461 = vmatpush1.bf16.msra.mxu0 0
    %462 = vmatprep.subr.bf16.mxu0 0
    %463 = vmatpush1.bf16.msra.mxu0 0
    %464 = vmatprep.subr.bf16.mxu0 0
    %465 = vmatpush1.bf16.msra.mxu0 0
    %466 = vmatprep.subr.bf16.mxu0 0
    %467 = vmatpush1.bf16.msra.mxu0 0
    %468 = vmatprep.mubr.bf16.mxu0 0
    %469 = vmatmul.mubr.bf16.gmra.mrb[0].mxu0 %v352
    %v470 = vpop.f32.mrb[0].mxu0
    %v471 = vadd.f32 %v398, %v470
    %v472 = vpop.f32.mrb[0].mxu0
    %v473 = vadd.f32 %v400, %v472
    %v474 = vpop.f32.mrb[0].mxu0
    %v475 = vadd.f32 %v402, %v474
    %v476 = vpop.f32.mrb[0].mxu0
    %v477 = vadd.f32 %v404, %v476
    %478 = vmatprep.mubr.bf16.mxu0 0
    %479 = vmatmul.mubr.bf16.gmra.mrb[0].mxu0 %v355
    %v480 = vpop.f32.mrb[0].mxu0
    %v481 = vadd.f32 %v408, %v480
    %v482 = vpop.f32.mrb[0].mxu0
    %v483 = vadd.f32 %v410, %v482
    %v484 = vpop.f32.mrb[0].mxu0
    %v485 = vadd.f32 %v412, %v484
    %v486 = vpop.f32.mrb[0].mxu0
    %v487 = vadd.f32 %v414, %v486
    %488 = vmatprep.mubr.bf16.mxu0 0
    %489 = vmatmul.mubr.bf16.gmra.mrb[0].mxu0 %v358
    %v490 = vpop.f32.mrb[0].mxu0
    %v491 = vadd.f32 %v418, %v490
    %v492 = vpop.f32.mrb[0].mxu0
    %v493 = vadd.f32 %v420, %v492
    %v494 = vpop.f32.mrb[0].mxu0
    %v495 = vadd.f32 %v422, %v494
    %v496 = vpop.f32.mrb[0].mxu0
    %v497 = vadd.f32 %v424, %v496
    %498 = vmatprep.mubr.bf16.mxu0 0
    %499 = vmatmul.mubr.bf16.gmra.mrb[0].mxu0 %v361
    %v500 = vpop.f32.mrb[0].mxu0
    %v501 = vadd.f32 %v428, %v500
    %v502 = vpop.f32.mrb[0].mxu0
    %v503 = vadd.f32 %v430, %v502
    %v504 = vpop.f32.mrb[0].mxu0
    %v505 = vadd.f32 %v432, %v504
    %v506 = vpop.f32.mrb[0].mxu0
    %v507 = vadd.f32 %v434, %v506
    %508 = vdwg.mxu0
    %v509 = vmax.f32 %v471, 0.0
    %v510 = vmax.f32 %v473, 0.0
    %v511 = vmax.f32 %v475, 0.0
    %v512 = vmax.f32 %v477, 0.0
    %v513 = vmax.f32 %v481, 0.0
    %v514 = vmax.f32 %v483, 0.0
    %v515 = vmax.f32 %v485, 0.0
    %v516 = vmax.f32 %v487, 0.0
    %v517 = vmax.f32 %v491, 0.0
    %v518 = vmax.f32 %v493, 0.0
    %v519 = vmax.f32 %v495, 0.0
    %v520 = vmax.f32 %v497, 0.0
    %v521 = vmax.f32 %v501, 0.0
    %v522 = vmax.f32 %v503, 0.0
    %v523 = vmax.f32 %v505, 0.0
    %v524 = vmax.f32 %v507, 0.0
    %vm541 = vcmask 1046528
    %v542 = vrot.slane %v509, 1
    %v543 = vrot.slane %v511, 1
    %v544 = vsel %vm541, %v542, %v543
    %v545 = vrot.slane %v510, 1
    %v546 = vrot.slane %v512, 1
    %v547 = vsel %vm541, %v545, %v546
    %v548 = vrot.slane %v513, 1
    %v549 = vsel %vm541, %v543, %v548
    %v550 = vrot.slane %v514, 1
    %v551 = vsel %vm541, %v546, %v550
    %v552 = vrot.slane %v515, 1
    %v553 = vsel %vm541, %v548, %v552
    %v554 = vrot.slane %v516, 1
    %v555 = vsel %vm541, %v550, %v554
    %v556 = vrot.slane %v517, 1
    %v557 = vsel %vm541, %v552, %v556
    %v558 = vrot.slane %v518, 1
    %v559 = vsel %vm541, %v554, %v558
    %v560 = vrot.slane %v519, 1
    %v561 = vsel %vm541, %v556, %v560
    %v562 = vrot.slane %v520, 1
    %v563 = vsel %vm541, %v558, %v562
    %v564 = vrot.slane %v521, 1
    %v565 = vsel %vm541, %v560, %v564
    %v566 = vrot.slane %v522, 1
    %v567 = vsel %vm541, %v562, %v566
    %v568 = vrot.slane %v523, 1
    %v569 = vsel %vm541, %v564, %v568
    %v570 = vrot.slane %v524, 1
    %v571 = vsel %vm541, %v566, %v570
    %v588 = vsel %vm541, %v568, 0.0
    %v589 = vsel %vm541, %v570, 0.0
    %v590 = vmax.f32 %v509, %v544
    %v591 = vmax.f32 %v510, %v547
    %v592 = vmax.f32 %v511, %v549
    %v593 = vmax.f32 %v512, %v551
    %v594 = vmax.f32 %v513, %v553
    %v595 = vmax.f32 %v514, %v555
    %v596 = vmax.f32 %v515, %v557
    %v597 = vmax.f32 %v516, %v559
    %v598 = vmax.f32 %v517, %v561
    %v599 = vmax.f32 %v518, %v563
    %v600 = vmax.f32 %v519, %v565
    %v601 = vmax.f32 %v520, %v567
    %v602 = vmax.f32 %v521, %v569
    %v603 = vmax.f32 %v522, %v571
    %v604 = vmax.f32 %v523, %v588
    %v605 = vmax.f32 %v524, %v589
    %622 = vrot.lane.b32.xlu0 %v590, 120
    %v623 = vpop.permute.xlu0 %622
    %624 = vrot.lane.b32.xlu0 %v591, 120
    %v625 = vpop.permute.xlu0 %624
    %626 = vrot.lane.b32.xlu0 %v592, 120
    %v627 = vpop.permute.xlu0 %626
    %628 = vrot.lane.b32.xlu0 %v593, 120
    %v629 = vpop.permute.xlu0 %628
    %630 = vrot.lane.b32.xlu0 %v594, 120
    %v631 = vpop.permute.xlu0 %630
    %632 = vrot.lane.b32.xlu0 %v595, 120
    %v633 = vpop.permute.xlu0 %632
    %634 = vrot.lane.b32.xlu0 %v596, 120
    %v635 = vpop.permute.xlu0 %634
    %636 = vrot.lane.b32.xlu0 %v597, 120
    %v637 = vpop.permute.xlu0 %636
    %638 = vrot.lane.b32.xlu0 %v598, 120
    %v639 = vpop.permute.xlu0 %638
    %640 = vrot.lane.b32.xlu0 %v599, 120
    %v641 = vpop.permute.xlu0 %640
    %642 = vrot.lane.b32.xlu0 %v600, 120
    %v643 = vpop.permute.xlu0 %642
    %644 = vrot.lane.b32.xlu0 %v601, 120
    %v645 = vpop.permute.xlu0 %644
    %646 = vrot.lane.b32.xlu0 %v602, 120
    %v647 = vpop.permute.xlu0 %646
    %648 = vrot.lane.b32.xlu0 %v603, 120
    %v649 = vpop.permute.xlu0 %648
    %650 = vrot.lane.b32.xlu0 %v604, 120
    %v651 = vpop.permute.xlu0 %650
    %652 = vrot.lane.b32.xlu0 %v605, 120
    %v653 = vpop.permute.xlu0 %652
    %vm654 = vcmask 982016
    %v655 = vsel %vm654, %v623, %v625
    %v656 = vsel %vm654, %v627, %v629
    %v657 = vsel %vm654, %v631, %v633
    %v658 = vsel %vm654, %v635, %v637
    %v659 = vsel %vm654, %v639, %v641
    %v660 = vsel %vm654, %v643, %v645
    %v661 = vsel %vm654, %v647, %v649
    %v662 = vsel %vm654, %v651, %v653
    %v679 = vsel %vm654, %v625, 0.0
    %v680 = vsel %vm654, %v629, 0.0
    %v681 = vsel %vm654, %v633, 0.0
    %v682 = vsel %vm654, %v637, 0.0
    %v683 = vsel %vm654, %v641, 0.0
    %v684 = vsel %vm654, %v645, 0.0
    %v685 = vsel %vm654, %v649, 0.0
    %v686 = vsel %vm654, %v653, 0.0
    %v687 = vmax.f32 %v590, %v655
    %v688 = vmax.f32 %v591, %v679
    %v689 = vmax.f32 %v592, %v656
    %v690 = vmax.f32 %v593, %v680
    %v691 = vmax.f32 %v594, %v657
    %v692 = vmax.f32 %v595, %v681
    %v693 = vmax.f32 %v596, %v658
    %v694 = vmax.f32 %v597, %v682
    %v695 = vmax.f32 %v598, %v659
    %v696 = vmax.f32 %v599, %v683
    %v697 = vmax.f32 %v600, %v660
    %v698 = vmax.f32 %v601, %v684
    %v699 = vmax.f32 %v602, %v661
    %v700 = vmax.f32 %v603, %v685
    %v701 = vmax.f32 %v604, %v662
    %v702 = vmax.f32 %v605, %v686
    %v703 = vld [vmem:[%s3] sm:$0xf]
    %v704 = vld [vmem:[%s3 + $0x4] sm:$0xf]
    %v705 = vld [vmem:[%s3 + $0x8] sm:$0xf]
    %v706 = vld [vmem:[%s3 + $0xc] sm:$0xf]
    %v707 = vld [vmem:[%s3 + $0x10] sm:$0xf]
    %v708 = vld [vmem:[%s3 + $0x14] sm:$0xf]
    %v709 = vld [vmem:[%s3 + $0x18] sm:$0xf]
    %v710 = vld [vmem:[%s3 + $0x1c] sm:$0xf]
    %v711 = vld [vmem:[%s3 + $0x20] sm:$0xf]
    %v712 = vld [vmem:[%s3 + $0x24] sm:$0xf]
    %v713 = vld [vmem:[%s3 + $0x28] sm:$0xf]
    %v714 = vld [vmem:[%s3 + $0x2c] sm:$0xf]
    %v715 = vpack.c.bf16 %v689, %v687
    %v716 = vpack.c.bf16 %v690, %v688
    %v717 = vpack.c.bf16 %v693, %v691
    %v718 = vpack.c.bf16 %v694, %v692
    %v719 = vpack.c.bf16 %v697, %v695
    %v720 = vpack.c.bf16 %v698, %v696
    %v721 = vpack.c.bf16 %v701, %v699
    %v722 = vpack.c.bf16 %v702, %v700
    %v735 = vunpack.c.l.b16 %v703
    %v736 = vunpack.c.l.b16 %v704
    %v737 = vunpack.c.l.b16 %v705
    %v738 = vunpack.c.l.b16 %v706
    %v739 = vunpack.c.l.b16 %v707
    %v740 = vunpack.c.l.b16 %v708
    %v741 = vunpack.c.l.b16 %v709
    %v742 = vunpack.c.l.b16 %v710
    %v743 = vunpack.c.l.b16 %v711
    %v744 = vunpack.c.l.b16 %v712
    %v745 = vunpack.c.l.b16 %v713
    %v746 = vunpack.c.l.b16 %v714
    %v747 = vpack.c.b16 %v736, %v735
    %v748 = vpack.c.b16 %v738, %v737
    %v749 = vpack.c.b16 %v740, %v739
    %v750 = vpack.c.b16 %v742, %v741
    %v751 = vpack.c.b16 %v744, %v743
    %v752 = vpack.c.b16 %v746, %v745
    %vm753 = vcmask 523264
    %v755 = vsel %vm753, %v747, 0
    %v758 = vsel %vm753, %v748, 0
    %v761 = vsel %vm753, %v749, 0
    %v764 = vsel %vm753, %v750, 0
    %v767 = vsel %vm753, %v751, 0
    %v770 = vsel %vm753, %v752, 0
    %772 = vmatprep.subr.bf16.mxu0 %v716
    %773 = vmatpush1.bf16.msra.mxu0 %v715
    %774 = vmatprep.subr.bf16.mxu0 %v718
    %775 = vmatpush1.bf16.msra.mxu0 %v717
    %776 = vmatprep.subr.bf16.mxu0 %v720
    %777 = vmatpush1.bf16.msra.mxu0 %v719
    %778 = vmatprep.subr.bf16.mxu0 %v722
    %779 = vmatpush1.bf16.msra.mxu0 %v721
    %780 = vmatprep.subr.bf16.mxu0 0
    %781 = vmatpush1.bf16.msra.mxu0 0
    %782 = vmatprep.subr.bf16.mxu0 0
    %783 = vmatpush1.bf16.msra.mxu0 0
    %784 = vmatprep.subr.bf16.mxu0 0
    %785 = vmatpush1.bf16.msra.mxu0 0
    %786 = vmatprep.subr.bf16.mxu0 0
    %787 = vmatpush1.bf16.msra.mxu0 0
    %788 = vmatprep.subr.bf16.mxu0 0
    %789 = vmatpush1.bf16.msra.mxu0 0
    %790 = vmatprep.subr.bf16.mxu0 0
    %791 = vmatpush1.bf16.msra.mxu0 0
    %792 = vmatprep.subr.bf16.mxu0 0
    %793 = vmatpush1.bf16.msra.mxu0 0
    %794 = vmatprep.subr.bf16.mxu0 0
    %795 = vmatpush1.bf16.msra.mxu0 0
    %796 = vmatprep.subr.bf16.mxu0 0
    %797 = vmatpush1.bf16.msra.mxu0 0
    %798 = vmatprep.subr.bf16.mxu0 0
    %799 = vmatpush1.bf16.msra.mxu0 0
    %800 = vmatprep.subr.bf16.mxu0 0
    %801 = vmatpush1.bf16.msra.mxu0 0
    %802 = vmatprep.subr.bf16.mxu0 0
    %803 = vmatpush1.bf16.msra.mxu0 0
    %804 = vmatprep.mubr.bf16.mxu0 0
    %805 = vmatmul.mubr.bf16.gmra.mrb[0].mxu0 %v755
    %v806 = vpop.f32.mrb[0].mxu0
    %v807 = vadd.f32 0.0, %v806
    %v808 = vpop.f32.mrb[0].mxu0
    %v809 = vadd.f32 0.0, %v808
    %v810 = vpop.f32.mrb[0].mxu0
    %v811 = vadd.f32 0.0, %v810
    %v812 = vpop.f32.mrb[0].mxu0
    %v813 = vadd.f32 0.0, %v812
    %814 = vmatprep.mubr.bf16.mxu0 0
    %815 = vmatmul.mubr.bf16.gmra.mrb[0].mxu0 %v758
    %v816 = vpop.f32.mrb[0].mxu0
    %v817 = vadd.f32 0.0, %v816
    %v818 = vpop.f32.mrb[0].mxu0
    %v819 = vadd.f32 0.0, %v818
    %v820 = vpop.f32.mrb[0].mxu0
    %v821 = vadd.f32 0.0, %v820
    %v822 = vpop.f32.mrb[0].mxu0
    %v823 = vadd.f32 0.0, %v822
    %824 = vmatprep.mubr.bf16.mxu0 0
    %825 = vmatmul.mubr.bf16.gmra.mrb[0].mxu0 %v761
    %v826 = vpop.f32.mrb[0].mxu0
    %v827 = vadd.f32 0.0, %v826
    %v828 = vpop.f32.mrb[0].mxu0
    %v829 = vadd.f32 0.0, %v828
    %v830 = vpop.f32.mrb[0].mxu0
    %v831 = vadd.f32 0.0, %v830
    %v832 = vpop.f32.mrb[0].mxu0
    %v833 = vadd.f32 0.0, %v832
    %834 = vmatprep.mubr.bf16.mxu0 0
    %835 = vmatmul.mubr.bf16.gmra.mrb[0].mxu0 %v764
    %v836 = vpop.f32.mrb[0].mxu0
    %v837 = vadd.f32 0.0, %v836
    %v838 = vpop.f32.mrb[0].mxu0
    %v839 = vadd.f32 0.0, %v838
    %v840 = vpop.f32.mrb[0].mxu0
    %v841 = vadd.f32 0.0, %v840
    %v842 = vpop.f32.mrb[0].mxu0
    %v843 = vadd.f32 0.0, %v842
    %844 = vmatprep.mubr.bf16.mxu0 0
    %845 = vmatmul.mubr.bf16.gmra.mrb[0].mxu0 %v767
    %v846 = vpop.f32.mrb[0].mxu0
    %v847 = vadd.f32 0.0, %v846
    %v848 = vpop.f32.mrb[0].mxu0
    %v849 = vadd.f32 0.0, %v848
    %v850 = vpop.f32.mrb[0].mxu0
    %v851 = vadd.f32 0.0, %v850
    %v852 = vpop.f32.mrb[0].mxu0
    %v853 = vadd.f32 0.0, %v852
    %854 = vmatprep.mubr.bf16.mxu0 0
    %855 = vmatmul.mubr.bf16.gmra.mrb[0].mxu0 %v770
    %v856 = vpop.f32.mrb[0].mxu0
    %v857 = vadd.f32 0.0, %v856
    %v858 = vpop.f32.mrb[0].mxu0
    %v859 = vadd.f32 0.0, %v858
    %v860 = vpop.f32.mrb[0].mxu0
    %v861 = vadd.f32 0.0, %v860
    %v862 = vpop.f32.mrb[0].mxu0
    %v863 = vadd.f32 0.0, %v862
    %864 = vdwg.mxu0
    %v865 = vpack.c.bf16 %v811, %v807
    %v866 = vpack.c.bf16 %v813, %v809
    %v867 = vpack.c.bf16 %v831, %v827
    %v868 = vpack.c.bf16 %v833, %v829
    %v869 = vpack.c.bf16 %v851, %v847
    %v870 = vpack.c.bf16 %v853, %v849
    %v871 = vpack.c.bf16 %v821, %v817
    %v872 = vpack.c.bf16 %v823, %v819
    %v873 = vpack.c.bf16 %v841, %v837
    %v874 = vpack.c.bf16 %v843, %v839
    %v875 = vpack.c.bf16 %v861, %v857
    %v876 = vpack.c.bf16 %v863, %v859
    %v877 = vld [vmem:[%s4] sm:$0xff]
    %v878 = vld [vmem:[%s4 + $0x8] sm:$0xff]
    %v879 = vld [vmem:[%s4 + $0x10] sm:$0xff]
    %v880 = vld [vmem:[%s4 + $0x18] sm:$0xff]
    %v881 = vld [vmem:[%s4 + $0x20] sm:$0xff]
    %v882 = vld [vmem:[%s4 + $0x28] sm:$0xff]
    %v883 = vld [vmem:[%s4 + $0x30] sm:$0xff]
    %v884 = vld [vmem:[%s4 + $0x38] sm:$0xff]
    %v885 = vld [vmem:[%s4 + $0x40] sm:$0xff]
    %v886 = vld [vmem:[%s4 + $0x48] sm:$0xff]
    %v887 = vld [vmem:[%s4 + $0x50] sm:$0xff]
    %v888 = vld [vmem:[%s4 + $0x58] sm:$0xff]
    %v889 = vld [vmem:[%s4 + $0x60] sm:$0xff]
    %v890 = vld [vmem:[%s4 + $0x68] sm:$0xff]
    %v891 = vld [vmem:[%s4 + $0x70] sm:$0xff]
    %v892 = vld [vmem:[%s4 + $0x78] sm:$0xff]
    %v893 = vld [vmem:[%s4 + $0x80] sm:$0xff]
    %v894 = vld [vmem:[%s4 + $0x88] sm:$0xff]
    %v895 = vld [vmem:[%s4 + $0x90] sm:$0xff]
    %v896 = vld [vmem:[%s4 + $0x98] sm:$0xff]
    %v897 = vld [vmem:[%s4 + $0xa0] sm:$0xff]
    %v898 = vld [vmem:[%s4 + $0xa8] sm:$0xff]
    %v899 = vld [vmem:[%s4 + $0xb0] sm:$0xff]
    %v900 = vld [vmem:[%s4 + $0xb8] sm:$0xff]
    %v901 = vld [vmem:[%s4 + $0xc0] sm:$0xff]
    %v902 = vld [vmem:[%s4 + $0xc8] sm:$0xff]
    %v903 = vld [vmem:[%s4 + $0xd0] sm:$0xff]
    %v904 = vld [vmem:[%s4 + $0xd8] sm:$0xff]
    %v905 = vld [vmem:[%s4 + $0xe0] sm:$0xff]
    %v906 = vld [vmem:[%s4 + $0xe8] sm:$0xff]
    %v907 = vld [vmem:[%s4 + $0xf0] sm:$0xff]
    %v908 = vld [vmem:[%s4 + $0xf8] sm:$0xff]
    %v909 = vld [vmem:[%s4 + $0x100] sm:$0xff]
    %v910 = vld [vmem:[%s4 + $0x108] sm:$0xff]
    %v911 = vld [vmem:[%s4 + $0x110] sm:$0xff]
    %v912 = vld [vmem:[%s4 + $0x118] sm:$0xff]
    %v913 = vld [vmem:[%s4 + $0x120] sm:$0xff]
    %v914 = vld [vmem:[%s4 + $0x128] sm:$0xff]
    %v915 = vld [vmem:[%s4 + $0x130] sm:$0xff]
    %v916 = vld [vmem:[%s4 + $0x138] sm:$0xff]
    %v917 = vld [vmem:[%s4 + $0x140] sm:$0xff]
    %v918 = vld [vmem:[%s4 + $0x148] sm:$0xff]
    %v919 = vld [vmem:[%s4 + $0x150] sm:$0xff]
    %v920 = vld [vmem:[%s4 + $0x158] sm:$0xff]
    %v921 = vld [vmem:[%s4 + $0x160] sm:$0xff]
    %v922 = vld [vmem:[%s4 + $0x168] sm:$0xff]
    %v923 = vld [vmem:[%s4 + $0x170] sm:$0xff]
    %v924 = vld [vmem:[%s4 + $0x178] sm:$0xff]
    %v925 = vld [vmem:[%s4 + $0x180] sm:$0xff]
    %v926 = vld [vmem:[%s4 + $0x188] sm:$0xff]
    %v927 = vld [vmem:[%s4 + $0x190] sm:$0xff]
    %v928 = vld [vmem:[%s4 + $0x198] sm:$0xff]
    %v929 = vld [vmem:[%s4 + $0x1a0] sm:$0xff]
    %v930 = vld [vmem:[%s4 + $0x1a8] sm:$0xff]
    %v931 = vld [vmem:[%s4 + $0x1b0] sm:$0xff]
    %v932 = vld [vmem:[%s4 + $0x1b8] sm:$0xff]
    %v933 = vld [vmem:[%s4 + $0x1c0] sm:$0xff]
    %v934 = vld [vmem:[%s4 + $0x1c8] sm:$0xff]
    %v935 = vld [vmem:[%s4 + $0x1d0] sm:$0xff]
    %v936 = vld [vmem:[%s4 + $0x1d8] sm:$0xff]
    %v937 = vld [vmem:[%s4 + $0x1e0] sm:$0xff]
    %v938 = vld [vmem:[%s4 + $0x1e8] sm:$0xff]
    %v939 = vld [vmem:[%s4 + $0x1f0] sm:$0xff]
    %v940 = vld [vmem:[%s4 + $0x1f8] sm:$0xff]
    %v941 = vld [vmem:[%s4 + $0x200] sm:$0xff]
    %v942 = vld [vmem:[%s4 + $0x208] sm:$0xff]
    %v943 = vld [vmem:[%s4 + $0x210] sm:$0xff]
    %v944 = vld [vmem:[%s4 + $0x218] sm:$0xff]
    %v945 = vld [vmem:[%s4 + $0x220] sm:$0xff]
    %v946 = vld [vmem:[%s4 + $0x228] sm:$0xff]
    %v947 = vld [vmem:[%s4 + $0x230] sm:$0xff]
    %v948 = vld [vmem:[%s4 + $0x238] sm:$0xff]
    %v949 = vld [vmem:[%s4 + $0x240] sm:$0xff]
    %v950 = vld [vmem:[%s4 + $0x248] sm:$0xff]
    %v951 = vld [vmem:[%s4 + $0x250] sm:$0xff]
    %v952 = vld [vmem:[%s4 + $0x258] sm:$0xff]
    %v953 = vld [vmem:[%s4 + $0x260] sm:$0xff]
    %v954 = vld [vmem:[%s4 + $0x268] sm:$0xff]
    %v955 = vld [vmem:[%s4 + $0x270] sm:$0xff]
    %v956 = vld [vmem:[%s4 + $0x278] sm:$0xff]
    %v957 = vld [vmem:[%s4 + $0x280] sm:$0xff]
    %v958 = vld [vmem:[%s4 + $0x288] sm:$0xff]
    %v959 = vld [vmem:[%s4 + $0x290] sm:$0xff]
    %v960 = vld [vmem:[%s4 + $0x298] sm:$0xff]
    %v961 = vld [vmem:[%s4 + $0x2a0] sm:$0xff]
    %v962 = vld [vmem:[%s4 + $0x2a8] sm:$0xff]
    %v963 = vld [vmem:[%s4 + $0x2b0] sm:$0xff]
    %v964 = vld [vmem:[%s4 + $0x2b8] sm:$0xff]
    %v965 = vld [vmem:[%s4 + $0x2c0] sm:$0xff]
    %v966 = vld [vmem:[%s4 + $0x2c8] sm:$0xff]
    %v967 = vld [vmem:[%s4 + $0x2d0] sm:$0xff]
    %v968 = vld [vmem:[%s4 + $0x2d8] sm:$0xff]
    %v969 = vld [vmem:[%s4 + $0x2e0] sm:$0xff]
    %v970 = vld [vmem:[%s4 + $0x2e8] sm:$0xff]
    %v971 = vld [vmem:[%s4 + $0x2f0] sm:$0xff]
    %v972 = vld [vmem:[%s4 + $0x2f8] sm:$0xff]
    %v973 = vld [vmem:[%s5] sm:$0x3]
    %v975 = vlaneseq
    %v976 = vshrl.u32 %v975, 7
    %v977 = vsub.s32 0, %v976
    %v978 = vrot.slane %v973, %v977
    %v979 = vlaneseq
    %v980 = vshrl.u32 %v979, 7
    %v981 = vsub.s32 1, %v980
    %v982 = vrot.slane %v973, %v981
    %v1081 = vunpack.c.l.b16 %v877
    %v1082 = vunpack.c.h.b16 %v877
    %v1083 = vunpack.c.l.b16 %v878
    %v1084 = vunpack.c.h.b16 %v878
    %v1085 = vunpack.c.l.b16 %v879
    %v1086 = vunpack.c.h.b16 %v879
    %v1087 = vunpack.c.l.b16 %v880
    %v1088 = vunpack.c.h.b16 %v880
    %v1089 = vunpack.c.l.b16 %v881
    %v1090 = vunpack.c.h.b16 %v881
    %v1091 = vunpack.c.l.b16 %v882
    %v1092 = vunpack.c.h.b16 %v882
    %v1093 = vunpack.c.l.b16 %v883
    %v1094 = vunpack.c.h.b16 %v883
    %v1095 = vunpack.c.l.b16 %v884
    %v1096 = vunpack.c.h.b16 %v884
    %v1097 = vunpack.c.l.b16 %v885
    %v1098 = vunpack.c.h.b16 %v885
    %v1099 = vunpack.c.l.b16 %v886
    %v1100 = vunpack.c.h.b16 %v886
    %v1101 = vunpack.c.l.b16 %v887
    %v1102 = vunpack.c.h.b16 %v887
    %v1103 = vunpack.c.l.b16 %v888
    %v1104 = vunpack.c.h.b16 %v888
    %v1105 = vunpack.c.l.b16 %v889
    %v1106 = vunpack.c.h.b16 %v889
    %v1107 = vunpack.c.l.b16 %v890
    %v1108 = vunpack.c.h.b16 %v890
    %v1109 = vunpack.c.l.b16 %v891
    %v1110 = vunpack.c.h.b16 %v891
    %v1111 = vunpack.c.l.b16 %v892
    %v1112 = vunpack.c.h.b16 %v892
    %v1113 = vunpack.c.l.b16 %v893
    %v1114 = vunpack.c.h.b16 %v893
    %v1115 = vunpack.c.l.b16 %v894
    %v1116 = vunpack.c.h.b16 %v894
    %v1117 = vunpack.c.l.b16 %v895
    %v1118 = vunpack.c.h.b16 %v895
    %v1119 = vunpack.c.l.b16 %v896
    %v1120 = vunpack.c.h.b16 %v896
    %v1121 = vunpack.c.l.b16 %v897
    %v1122 = vunpack.c.h.b16 %v897
    %v1123 = vunpack.c.l.b16 %v898
    %v1124 = vunpack.c.h.b16 %v898
    %v1125 = vunpack.c.l.b16 %v899
    %v1126 = vunpack.c.h.b16 %v899
    %v1127 = vunpack.c.l.b16 %v900
    %v1128 = vunpack.c.h.b16 %v900
    %v1129 = vunpack.c.l.b16 %v901
    %v1130 = vunpack.c.h.b16 %v901
    %v1131 = vunpack.c.l.b16 %v902
    %v1132 = vunpack.c.h.b16 %v902
    %v1133 = vunpack.c.l.b16 %v903
    %v1134 = vunpack.c.h.b16 %v903
    %v1135 = vunpack.c.l.b16 %v904
    %v1136 = vunpack.c.h.b16 %v904
    %v1137 = vunpack.c.l.b16 %v905
    %v1138 = vunpack.c.h.b16 %v905
    %v1139 = vunpack.c.l.b16 %v906
    %v1140 = vunpack.c.h.b16 %v906
    %v1141 = vunpack.c.l.b16 %v907
    %v1142 = vunpack.c.h.b16 %v907
    %v1143 = vunpack.c.l.b16 %v908
    %v1144 = vunpack.c.h.b16 %v908
    %v1145 = vunpack.c.l.b16 %v909
    %v1146 = vunpack.c.h.b16 %v909
    %v1147 = vunpack.c.l.b16 %v910
    %v1148 = vunpack.c.h.b16 %v910
    %v1149 = vunpack.c.l.b16 %v911
    %v1150 = vunpack.c.h.b16 %v911
    %v1151 = vunpack.c.l.b16 %v912
    %v1152 = vunpack.c.h.b16 %v912
    %v1153 = vunpack.c.l.b16 %v913
    %v1154 = vunpack.c.h.b16 %v913
    %v1155 = vunpack.c.l.b16 %v914
    %v1156 = vunpack.c.h.b16 %v914
    %v1157 = vunpack.c.l.b16 %v915
    %v1158 = vunpack.c.h.b16 %v915
    %v1159 = vunpack.c.l.b16 %v916
    %v1160 = vunpack.c.h.b16 %v916
    %v1161 = vunpack.c.l.b16 %v917
    %v1162 = vunpack.c.h.b16 %v917
    %v1163 = vunpack.c.l.b16 %v918
    %v1164 = vunpack.c.h.b16 %v918
    %v1165 = vunpack.c.l.b16 %v919
    %v1166 = vunpack.c.h.b16 %v919
    %v1167 = vunpack.c.l.b16 %v920
    %v1168 = vunpack.c.h.b16 %v920
    %v1169 = vunpack.c.l.b16 %v921
    %v1170 = vunpack.c.h.b16 %v921
    %v1171 = vunpack.c.l.b16 %v922
    %v1172 = vunpack.c.h.b16 %v922
    %v1173 = vunpack.c.l.b16 %v923
    %v1174 = vunpack.c.h.b16 %v923
    %v1175 = vunpack.c.l.b16 %v924
    %v1176 = vunpack.c.h.b16 %v924
    %v1177 = vunpack.c.l.b16 %v925
    %v1178 = vunpack.c.h.b16 %v925
    %v1179 = vunpack.c.l.b16 %v926
    %v1180 = vunpack.c.h.b16 %v926
    %v1181 = vunpack.c.l.b16 %v927
    %v1182 = vunpack.c.h.b16 %v927
    %v1183 = vunpack.c.l.b16 %v928
    %v1184 = vunpack.c.h.b16 %v928
    %v1185 = vunpack.c.l.b16 %v929
    %v1186 = vunpack.c.h.b16 %v929
    %v1187 = vunpack.c.l.b16 %v930
    %v1188 = vunpack.c.h.b16 %v930
    %v1189 = vunpack.c.l.b16 %v931
    %v1190 = vunpack.c.h.b16 %v931
    %v1191 = vunpack.c.l.b16 %v932
    %v1192 = vunpack.c.h.b16 %v932
    %v1193 = vunpack.c.l.b16 %v933
    %v1194 = vunpack.c.h.b16 %v933
    %v1195 = vunpack.c.l.b16 %v934
    %v1196 = vunpack.c.h.b16 %v934
    %v1197 = vunpack.c.l.b16 %v935
    %v1198 = vunpack.c.h.b16 %v935
    %v1199 = vunpack.c.l.b16 %v936
    %v1200 = vunpack.c.h.b16 %v936
    %v1201 = vunpack.c.l.b16 %v937
    %v1202 = vunpack.c.h.b16 %v937
    %v1203 = vunpack.c.l.b16 %v938
    %v1204 = vunpack.c.h.b16 %v938
    %v1205 = vunpack.c.l.b16 %v939
    %v1206 = vunpack.c.h.b16 %v939
    %v1207 = vunpack.c.l.b16 %v940
    %v1208 = vunpack.c.h.b16 %v940
    %v1209 = vunpack.c.l.b16 %v941
    %v1210 = vunpack.c.h.b16 %v941
    %v1211 = vunpack.c.l.b16 %v942
    %v1212 = vunpack.c.h.b16 %v942
    %v1213 = vunpack.c.l.b16 %v943
    %v1214 = vunpack.c.h.b16 %v943
    %v1215 = vunpack.c.l.b16 %v944
    %v1216 = vunpack.c.h.b16 %v944
    %v1217 = vunpack.c.l.b16 %v945
    %v1218 = vunpack.c.h.b16 %v945
    %v1219 = vunpack.c.l.b16 %v946
    %v1220 = vunpack.c.h.b16 %v946
    %v1221 = vunpack.c.l.b16 %v947
    %v1222 = vunpack.c.h.b16 %v947
    %v1223 = vunpack.c.l.b16 %v948
    %v1224 = vunpack.c.h.b16 %v948
    %v1225 = vunpack.c.l.b16 %v949
    %v1226 = vunpack.c.h.b16 %v949
    %v1227 = vunpack.c.l.b16 %v950
    %v1228 = vunpack.c.h.b16 %v950
    %v1229 = vunpack.c.l.b16 %v951
    %v1230 = vunpack.c.h.b16 %v951
    %v1231 = vunpack.c.l.b16 %v952
    %v1232 = vunpack.c.h.b16 %v952
    %v1233 = vunpack.c.l.b16 %v953
    %v1234 = vunpack.c.h.b16 %v953
    %v1235 = vunpack.c.l.b16 %v954
    %v1236 = vunpack.c.h.b16 %v954
    %v1237 = vunpack.c.l.b16 %v955
    %v1238 = vunpack.c.h.b16 %v955
    %v1239 = vunpack.c.l.b16 %v956
    %v1240 = vunpack.c.h.b16 %v956
    %v1241 = vunpack.c.l.b16 %v957
    %v1242 = vunpack.c.h.b16 %v957
    %v1243 = vunpack.c.l.b16 %v958
    %v1244 = vunpack.c.h.b16 %v958
    %v1245 = vunpack.c.l.b16 %v959
    %v1246 = vunpack.c.h.b16 %v959
    %v1247 = vunpack.c.l.b16 %v960
    %v1248 = vunpack.c.h.b16 %v960
    %v1249 = vunpack.c.l.b16 %v961
    %v1250 = vunpack.c.h.b16 %v961
    %v1251 = vunpack.c.l.b16 %v962
    %v1252 = vunpack.c.h.b16 %v962
    %v1253 = vunpack.c.l.b16 %v963
    %v1254 = vunpack.c.h.b16 %v963
    %v1255 = vunpack.c.l.b16 %v964
    %v1256 = vunpack.c.h.b16 %v964
    %v1257 = vunpack.c.l.b16 %v965
    %v1258 = vunpack.c.h.b16 %v965
    %v1259 = vunpack.c.l.b16 %v966
    %v1260 = vunpack.c.h.b16 %v966
    %v1261 = vunpack.c.l.b16 %v967
    %v1262 = vunpack.c.h.b16 %v967
    %v1263 = vunpack.c.l.b16 %v968
    %v1264 = vunpack.c.h.b16 %v968
    %v1265 = vunpack.c.l.b16 %v969
    %v1266 = vunpack.c.h.b16 %v969
    %v1267 = vunpack.c.l.b16 %v970
    %v1268 = vunpack.c.h.b16 %v970
    %v1269 = vunpack.c.l.b16 %v971
    %v1270 = vunpack.c.h.b16 %v971
    %v1271 = vunpack.c.l.b16 %v972
    %v1272 = vunpack.c.h.b16 %v972
    %v1273 = vpack.c.b16 %v1083, %v1081
    %v1274 = vpack.c.b16 %v1084, %v1082
    %v1275 = vpack.c.b16 %v1087, %v1085
    %v1276 = vpack.c.b16 %v1088, %v1086
    %v1277 = vpack.c.b16 %v1091, %v1089
    %v1278 = vpack.c.b16 %v1092, %v1090
    %v1279 = vpack.c.b16 %v1095, %v1093
    %v1280 = vpack.c.b16 %v1096, %v1094
    %v1281 = vpack.c.b16 %v1099, %v1097
    %v1282 = vpack.c.b16 %v1100, %v1098
    %v1283 = vpack.c.b16 %v1103, %v1101
    %v1284 = vpack.c.b16 %v1104, %v1102
    %v1285 = vpack.c.b16 %v1107, %v1105
    %v1286 = vpack.c.b16 %v1108, %v1106
    %v1287 = vpack.c.b16 %v1111, %v1109
    %v1288 = vpack.c.b16 %v1112, %v1110
    %v1289 = vpack.c.b16 %v1115, %v1113
    %v1290 = vpack.c.b16 %v1116, %v1114
    %v1291 = vpack.c.b16 %v1119, %v1117
    %v1292 = vpack.c.b16 %v1120, %v1118
    %v1293 = vpack.c.b16 %v1123, %v1121
    %v1294 = vpack.c.b16 %v1124, %v1122
    %v1295 = vpack.c.b16 %v1127, %v1125
    %v1296 = vpack.c.b16 %v1128, %v1126
    %v1297 = vpack.c.b16 %v1131, %v1129
    %v1298 = vpack.c.b16 %v1132, %v1130
    %v1299 = vpack.c.b16 %v1135, %v1133
    %v1300 = vpack.c.b16 %v1136, %v1134
    %v1301 = vpack.c.b16 %v1139, %v1137
    %v1302 = vpack.c.b16 %v1140, %v1138
    %v1303 = vpack.c.b16 %v1143, %v1141
    %v1304 = vpack.c.b16 %v1144, %v1142
    %v1305 = vpack.c.b16 %v1147, %v1145
    %v1306 = vpack.c.b16 %v1148, %v1146
    %v1307 = vpack.c.b16 %v1151, %v1149
    %v1308 = vpack.c.b16 %v1152, %v1150
    %v1309 = vpack.c.b16 %v1155, %v1153
    %v1310 = vpack.c.b16 %v1156, %v1154
    %v1311 = vpack.c.b16 %v1159, %v1157
    %v1312 = vpack.c.b16 %v1160, %v1158
    %v1313 = vpack.c.b16 %v1163, %v1161
    %v1314 = vpack.c.b16 %v1164, %v1162
    %v1315 = vpack.c.b16 %v1167, %v1165
    %v1316 = vpack.c.b16 %v1168, %v1166
    %v1317 = vpack.c.b16 %v1171, %v1169
    %v1318 = vpack.c.b16 %v1172, %v1170
    %v1319 = vpack.c.b16 %v1175, %v1173
    %v1320 = vpack.c.b16 %v1176, %v1174
    %v1321 = vpack.c.b16 %v1179, %v1177
    %v1322 = vpack.c.b16 %v1180, %v1178
    %v1323 = vpack.c.b16 %v1183, %v1181
    %v1324 = vpack.c.b16 %v1184, %v1182
    %v1325 = vpack.c.b16 %v1187, %v1185
    %v1326 = vpack.c.b16 %v1188, %v1186
    %v1327 = vpack.c.b16 %v1191, %v1189
    %v1328 = vpack.c.b16 %v1192, %v1190
    %v1329 = vpack.c.b16 %v1195, %v1193
    %v1330 = vpack.c.b16 %v1196, %v1194
    %v1331 = vpack.c.b16 %v1199, %v1197
    %v1332 = vpack.c.b16 %v1200, %v1198
    %v1333 = vpack.c.b16 %v1203, %v1201
    %v1334 = vpack.c.b16 %v1204, %v1202
    %v1335 = vpack.c.b16 %v1207, %v1205
    %v1336 = vpack.c.b16 %v1208, %v1206
    %v1337 = vpack.c.b16 %v1211, %v1209
    %v1338 = vpack.c.b16 %v1212, %v1210
    %v1339 = vpack.c.b16 %v1215, %v1213
    %v1340 = vpack.c.b16 %v1216, %v1214
    %v1341 = vpack.c.b16 %v1219, %v1217
    %v1342 = vpack.c.b16 %v1220, %v1218
    %v1343 = vpack.c.b16 %v1223, %v1221
    %v1344 = vpack.c.b16 %v1224, %v1222
    %v1345 = vpack.c.b16 %v1227, %v1225
    %v1346 = vpack.c.b16 %v1228, %v1226
    %v1347 = vpack.c.b16 %v1231, %v1229
    %v1348 = vpack.c.b16 %v1232, %v1230
    %v1349 = vpack.c.b16 %v1235, %v1233
    %v1350 = vpack.c.b16 %v1236, %v1234
    %v1351 = vpack.c.b16 %v1239, %v1237
    %v1352 = vpack.c.b16 %v1240, %v1238
    %v1353 = vpack.c.b16 %v1243, %v1241
    %v1354 = vpack.c.b16 %v1244, %v1242
    %v1355 = vpack.c.b16 %v1247, %v1245
    %v1356 = vpack.c.b16 %v1248, %v1246
    %v1357 = vpack.c.b16 %v1251, %v1249
    %v1358 = vpack.c.b16 %v1252, %v1250
    %v1359 = vpack.c.b16 %v1255, %v1253
    %v1360 = vpack.c.b16 %v1256, %v1254
    %v1361 = vpack.c.b16 %v1259, %v1257
    %v1362 = vpack.c.b16 %v1260, %v1258
    %v1363 = vpack.c.b16 %v1263, %v1261
    %v1364 = vpack.c.b16 %v1264, %v1262
    %v1365 = vpack.c.b16 %v1267, %v1265
    %v1366 = vpack.c.b16 %v1268, %v1266
    %v1367 = vpack.c.b16 %v1271, %v1269
    %v1368 = vpack.c.b16 %v1272, %v1270
    %1465 = vmatprep.subr.bf16.mxu0 %v1274
    %1466 = vmatpush1.bf16.msra.mxu0 %v1273
    %1467 = vmatprep.subr.bf16.mxu0 %v1276
    %1468 = vmatpush1.bf16.msra.mxu0 %v1275
    %1469 = vmatprep.subr.bf16.mxu0 %v1278
    %1470 = vmatpush1.bf16.msra.mxu0 %v1277
    %1471 = vmatprep.subr.bf16.mxu0 %v1280
    %1472 = vmatpush1.bf16.msra.mxu0 %v1279
    %1473 = vmatprep.subr.bf16.mxu0 %v1282
    %1474 = vmatpush1.bf16.msra.mxu0 %v1281
    %1475 = vmatprep.subr.bf16.mxu0 %v1284
    %1476 = vmatpush1.bf16.msra.mxu0 %v1283
    %1477 = vmatprep.subr.bf16.mxu0 %v1286
    %1478 = vmatpush1.bf16.msra.mxu0 %v1285
    %1479 = vmatprep.subr.bf16.mxu0 %v1288
    %1480 = vmatpush1.bf16.msra.mxu0 %v1287
    %1481 = vmatprep.subr.bf16.mxu0 %v1290
    %1482 = vmatpush1.bf16.msra.mxu0 %v1289
    %1483 = vmatprep.subr.bf16.mxu0 %v1292
    %1484 = vmatpush1.bf16.msra.mxu0 %v1291
    %1485 = vmatprep.subr.bf16.mxu0 %v1294
    %1486 = vmatpush1.bf16.msra.mxu0 %v1293
    %1487 = vmatprep.subr.bf16.mxu0 %v1296
    %1488 = vmatpush1.bf16.msra.mxu0 %v1295
    %1489 = vmatprep.subr.bf16.mxu0 %v1298
    %1490 = vmatpush1.bf16.msra.mxu0 %v1297
    %1491 = vmatprep.subr.bf16.mxu0 %v1300
    %1492 = vmatpush1.bf16.msra.mxu0 %v1299
    %1493 = vmatprep.subr.bf16.mxu0 %v1302
    %1494 = vmatpush1.bf16.msra.mxu0 %v1301
    %1495 = vmatprep.subr.bf16.mxu0 %v1304
    %1496 = vmatpush1.bf16.msra.mxu0 %v1303
    %1497 = vmatprep.mubr.bf16.mxu0 %v866
    %1498 = vmatmul.mubr.bf16.gmra.mrb[0].mxu0 %v865
    %v1499 = vpop.f32.mrb[0].mxu0
    %v1500 = vadd.f32 %v978, %v1499
    %v1501 = vpop.f32.mrb[0].mxu0
    %v1502 = vadd.f32 %v982, %v1501
    %v1503 = vpop.f32.mrb[0].mxu0
    %v1504 = vadd.f32 %v978, %v1503
    %v1505 = vpop.f32.mrb[0].mxu0
    %v1506 = vadd.f32 %v982, %v1505
    %1507 = vmatprep.mubr.bf16.mxu0 %v872
    %1508 = vmatmul.mubr.bf16.gmra.mrb[0].mxu0 %v871
    %v1509 = vpop.f32.mrb[0].mxu0
    %v1510 = vadd.f32 %v978, %v1509
    %v1511 = vpop.f32.mrb[0].mxu0
    %v1512 = vadd.f32 %v982, %v1511
    %v1513 = vpop.f32.mrb[0].mxu0
    %v1514 = vadd.f32 %v978, %v1513
    %v1515 = vpop.f32.mrb[0].mxu0
    %v1516 = vadd.f32 %v982, %v1515
    %1517 = vdwg.mxu0
    %1518 = vmatprep.subr.bf16.mxu0 %v1306
    %1519 = vmatpush1.bf16.msra.mxu0 %v1305
    %1520 = vmatprep.subr.bf16.mxu0 %v1308
    %1521 = vmatpush1.bf16.msra.mxu0 %v1307
    %1522 = vmatprep.subr.bf16.mxu0 %v1310
    %1523 = vmatpush1.bf16.msra.mxu0 %v1309
    %1524 = vmatprep.subr.bf16.mxu0 %v1312
    %1525 = vmatpush1.bf16.msra.mxu0 %v1311
    %1526 = vmatprep.subr.bf16.mxu0 %v1314
    %1527 = vmatpush1.bf16.msra.mxu0 %v1313
    %1528 = vmatprep.subr.bf16.mxu0 %v1316
    %1529 = vmatpush1.bf16.msra.mxu0 %v1315
    %1530 = vmatprep.subr.bf16.mxu0 %v1318
    %1531 = vmatpush1.bf16.msra.mxu0 %v1317
    %1532 = vmatprep.subr.bf16.mxu0 %v1320
    %1533 = vmatpush1.bf16.msra.mxu0 %v1319
    %1534 = vmatprep.subr.bf16.mxu0 %v1322
    %1535 = vmatpush1.bf16.msra.mxu0 %v1321
    %1536 = vmatprep.subr.bf16.mxu0 %v1324
    %1537 = vmatpush1.bf16.msra.mxu0 %v1323
    %1538 = vmatprep.subr.bf16.mxu0 %v1326
    %1539 = vmatpush1.bf16.msra.mxu0 %v1325
    %1540 = vmatprep.subr.bf16.mxu0 %v1328
    %1541 = vmatpush1.bf16.msra.mxu0 %v1327
    %1542 = vmatprep.subr.bf16.mxu0 %v1330
    %1543 = vmatpush1.bf16.msra.mxu0 %v1329
    %1544 = vmatprep.subr.bf16.mxu0 %v1332
    %1545 = vmatpush1.bf16.msra.mxu0 %v1331
    %1546 = vmatprep.subr.bf16.mxu0 %v1334
    %1547 = vmatpush1.bf16.msra.mxu0 %v1333
    %1548 = vmatprep.subr.bf16.mxu0 %v1336
    %1549 = vmatpush1.bf16.msra.mxu0 %v1335
    %1550 = vmatprep.mubr.bf16.mxu0 %v868
    %1551 = vmatmul.mubr.bf16.gmra.mrb[0].mxu0 %v867
    %v1552 = vpop.f32.mrb[0].mxu0
    %v1553 = vadd.f32 %v1500, %v1552
    %v1554 = vpop.f32.mrb[0].mxu0
    %v1555 = vadd.f32 %v1502, %v1554
    %v1556 = vpop.f32.mrb[0].mxu0
    %v1557 = vadd.f32 %v1504, %v1556
    %v1558 = vpop.f32.mrb[0].mxu0
    %v1559 = vadd.f32 %v1506, %v1558
    %1560 = vmatprep.mubr.bf16.mxu0 %v874
    %1561 = vmatmul.mubr.bf16.gmra.mrb[0].mxu0 %v873
    %v1562 = vpop.f32.mrb[0].mxu0
    %v1563 = vadd.f32 %v1510, %v1562
    %v1564 = vpop.f32.mrb[0].mxu0
    %v1565 = vadd.f32 %v1512, %v1564
    %v1566 = vpop.f32.mrb[0].mxu0
    %v1567 = vadd.f32 %v1514, %v1566
    %v1568 = vpop.f32.mrb[0].mxu0
    %v1569 = vadd.f32 %v1516, %v1568
    %1570 = vdwg.mxu0
    %1571 = vmatprep.subr.bf16.mxu0 %v1338
    %1572 = vmatpush1.bf16.msra.mxu0 %v1337
    %1573 = vmatprep.subr.bf16.mxu0 %v1340
    %1574 = vmatpush1.bf16.msra.mxu0 %v1339
    %1575 = vmatprep.subr.bf16.mxu0 %v1342
    %1576 = vmatpush1.bf16.msra.mxu0 %v1341
    %1577 = vmatprep.subr.bf16.mxu0 %v1344
    %1578 = vmatpush1.bf16.msra.mxu0 %v1343
    %1579 = vmatprep.subr.bf16.mxu0 %v1346
    %1580 = vmatpush1.bf16.msra.mxu0 %v1345
    %1581 = vmatprep.subr.bf16.mxu0 %v1348
    %1582 = vmatpush1.bf16.msra.mxu0 %v1347
    %1583 = vmatprep.subr.bf16.mxu0 %v1350
    %1584 = vmatpush1.bf16.msra.mxu0 %v1349
    %1585 = vmatprep.subr.bf16.mxu0 %v1352
    %1586 = vmatpush1.bf16.msra.mxu0 %v1351
    %1587 = vmatprep.subr.bf16.mxu0 %v1354
    %1588 = vmatpush1.bf16.msra.mxu0 %v1353
    %1589 = vmatprep.subr.bf16.mxu0 %v1356
    %1590 = vmatpush1.bf16.msra.mxu0 %v1355
    %1591 = vmatprep.subr.bf16.mxu0 %v1358
    %1592 = vmatpush1.bf16.msra.mxu0 %v1357
    %1593 = vmatprep.subr.bf16.mxu0 %v1360
    %1594 = vmatpush1.bf16.msra.mxu0 %v1359
    %1595 = vmatprep.subr.bf16.mxu0 %v1362
    %1596 = vmatpush1.bf16.msra.mxu0 %v1361
    %1597 = vmatprep.subr.bf16.mxu0 %v1364
    %1598 = vmatpush1.bf16.msra.mxu0 %v1363
    %1599 = vmatprep.subr.bf16.mxu0 %v1366
    %1600 = vmatpush1.bf16.msra.mxu0 %v1365
    %1601 = vmatprep.subr.bf16.mxu0 %v1368
    %1602 = vmatpush1.bf16.msra.mxu0 %v1367
    %1603 = vmatprep.mubr.bf16.mxu0 %v870
    %1604 = vmatmul.mubr.bf16.gmra.mrb[0].mxu0 %v869
    %v1605 = vpop.f32.mrb[0].mxu0
    %v1606 = vadd.f32 %v1553, %v1605
    %v1607 = vpop.f32.mrb[0].mxu0
    %v1608 = vadd.f32 %v1555, %v1607
    %v1609 = vpop.f32.mrb[0].mxu0
    %v1610 = vadd.f32 %v1557, %v1609
    %v1611 = vpop.f32.mrb[0].mxu0
    %v1612 = vadd.f32 %v1559, %v1611
    %1613 = vmatprep.mubr.bf16.mxu0 %v876
    %1614 = vmatmul.mubr.bf16.gmra.mrb[0].mxu0 %v875
    %v1615 = vpop.f32.mrb[0].mxu0
    %v1616 = vadd.f32 %v1563, %v1615
    %v1617 = vpop.f32.mrb[0].mxu0
    %v1618 = vadd.f32 %v1565, %v1617
    %v1619 = vpop.f32.mrb[0].mxu0
    %v1620 = vadd.f32 %v1567, %v1619
    %v1621 = vpop.f32.mrb[0].mxu0
    %v1622 = vadd.f32 %v1569, %v1621
    %1623 = vdwg.mxu0
    %v1624 = vmax.f32 %v1606, 0.0
    %v1625 = vmax.f32 %v1608, 0.0
    %v1626 = vmax.f32 %v1610, 0.0
    %v1627 = vmax.f32 %v1612, 0.0
    %v1628 = vmax.f32 %v1616, 0.0
    %v1629 = vmax.f32 %v1618, 0.0
    %v1630 = vmax.f32 %v1620, 0.0
    %v1631 = vmax.f32 %v1622, 0.0
    %v1640 = vrot.slane %v1624, 1
    %v1641 = vrot.slane %v1626, 1
    %v1642 = vsel %vm541, %v1640, %v1641
    %v1643 = vrot.slane %v1625, 1
    %v1644 = vrot.slane %v1627, 1
    %v1645 = vsel %vm541, %v1643, %v1644
    %v1646 = vrot.slane %v1628, 1
    %v1647 = vsel %vm541, %v1641, %v1646
    %v1648 = vrot.slane %v1629, 1
    %v1649 = vsel %vm541, %v1644, %v1648
    %v1650 = vrot.slane %v1630, 1
    %v1651 = vsel %vm541, %v1646, %v1650
    %v1652 = vrot.slane %v1631, 1
    %v1653 = vsel %vm541, %v1648, %v1652
    %v1662 = vsel %vm541, %v1650, 0.0
    %v1663 = vsel %vm541, %v1652, 0.0
    %v1664 = vmax.f32 %v1624, %v1642
    %v1665 = vmax.f32 %v1625, %v1645
    %v1666 = vmax.f32 %v1626, %v1647
    %v1667 = vmax.f32 %v1627, %v1649
    %v1668 = vmax.f32 %v1628, %v1651
    %v1669 = vmax.f32 %v1629, %v1653
    %v1670 = vmax.f32 %v1630, %v1662
    %v1671 = vmax.f32 %v1631, %v1663
    %1680 = vrot.lane.b32.xlu0 %v1664, 112
    %v1681 = vpop.permute.xlu0 %1680
    %1682 = vrot.lane.b32.xlu0 %v1665, 112
    %v1683 = vpop.permute.xlu0 %1682
    %1684 = vrot.lane.b32.xlu0 %v1666, 112
    %v1685 = vpop.permute.xlu0 %1684
    %1686 = vrot.lane.b32.xlu0 %v1667, 112
    %v1687 = vpop.permute.xlu0 %1686
    %1688 = vrot.lane.b32.xlu0 %v1668, 112
    %v1689 = vpop.permute.xlu0 %1688
    %1690 = vrot.lane.b32.xlu0 %v1669, 112
    %v1691 = vpop.permute.xlu0 %1690
    %1692 = vrot.lane.b32.xlu0 %v1670, 112
    %v1693 = vpop.permute.xlu0 %1692
    %1694 = vrot.lane.b32.xlu0 %v1671, 112
    %v1695 = vpop.permute.xlu0 %1694
    %vm1696 = vcmask 916480
    %v1697 = vsel %vm1696, %v1681, %v1683
    %v1698 = vsel %vm1696, %v1685, %v1687
    %v1699 = vsel %vm1696, %v1689, %v1691
    %v1700 = vsel %vm1696, %v1693, %v1695
    %v1709 = vsel %vm1696, %v1683, 0.0
    %v1710 = vsel %vm1696, %v1687, 0.0
    %v1711 = vsel %vm1696, %v1691, 0.0
    %v1712 = vsel %vm1696, %v1695, 0.0
    %v1713 = vmax.f32 %v1664, %v1697
    %v1714 = vmax.f32 %v1665, %v1709
    %v1715 = vmax.f32 %v1666, %v1698
    %v1716 = vmax.f32 %v1667, %v1710
    %v1717 = vmax.f32 %v1668, %v1699
    %v1718 = vmax.f32 %v1669, %v1711
    %v1719 = vmax.f32 %v1670, %v1700
    %v1720 = vmax.f32 %v1671, %v1712
    %v1721 = vld [vmem:[%s6] sm:$0xf]
    %v1722 = vld [vmem:[%s6 + $0x4] sm:$0x3]
    %v1723 = vpack.c.bf16 %v1715, %v1713
    %v1724 = vpack.c.bf16 %v1716, %v1714
    %v1725 = vpack.c.bf16 %v1719, %v1717
    %v1726 = vpack.c.bf16 %v1720, %v1718
    %v1729 = vunpack.c.l.b16 %v1721
    %v1730 = vunpack.c.l.b16 %v1722
    %v1731 = vpack.c.b16 %v1730, %v1729
    %v1733 = vsel %vm350, %v1731, 0
    %1735 = vmatprep.subr.bf16.mxu0 %v1724
    %1736 = vmatpush1.bf16.msra.mxu0 %v1723
    %1737 = vmatprep.subr.bf16.mxu0 %v1726
    %1738 = vmatpush1.bf16.msra.mxu0 %v1725
    %1739 = vmatprep.subr.bf16.mxu0 0
    %1740 = vmatpush1.bf16.msra.mxu0 0
    %1741 = vmatprep.subr.bf16.mxu0 0
    %1742 = vmatpush1.bf16.msra.mxu0 0
    %1743 = vmatprep.subr.bf16.mxu0 0
    %1744 = vmatpush1.bf16.msra.mxu0 0
    %1745 = vmatprep.subr.bf16.mxu0 0
    %1746 = vmatpush1.bf16.msra.mxu0 0
    %1747 = vmatprep.subr.bf16.mxu0 0
    %1748 = vmatpush1.bf16.msra.mxu0 0
    %1749 = vmatprep.subr.bf16.mxu0 0
    %1750 = vmatpush1.bf16.msra.mxu0 0
    %1751 = vmatprep.subr.bf16.mxu0 0
    %1752 = vmatpush1.bf16.msra.mxu0 0
    %1753 = vmatprep.subr.bf16.mxu0 0
    %1754 = vmatpush1.bf16.msra.mxu0 0
    %1755 = vmatprep.subr.bf16.mxu0 0
    %1756 = vmatpush1.bf16.msra.mxu0 0
    %1757 = vmatprep.subr.bf16.mxu0 0
    %1758 = vmatpush1.bf16.msra.mxu0 0
    %1759 = vmatprep.subr.bf16.mxu0 0
    %1760 = vmatpush1.bf16.msra.mxu0 0
    %1761 = vmatprep.subr.bf16.mxu0 0
    %1762 = vmatpush1.bf16.msra.mxu0 0
    %1763 = vmatprep.subr.bf16.mxu0 0
    %1764 = vmatpush1.bf16.msra.mxu0 0
    %1765 = vmatprep.subr.bf16.mxu0 0
    %1766 = vmatpush1.bf16.msra.mxu0 0
    %1767 = vmatprep.mubr.bf16.mxu0 0
    %1768 = vmatmul.mubr.bf16.gmra.mrb[0].mxu0 %v1733
    %v1769 = vpop.f32.mrb[0].mxu0
    %v1770 = vadd.f32 0.0, %v1769
    %v1771 = vpop.f32.mrb[0].mxu0
    %v1772 = vadd.f32 0.0, %v1771
    %v1773 = vpop.f32.mrb[0].mxu0
    %v1774 = vadd.f32 0.0, %v1773
    %v1775 = vpop.f32.mrb[0].mxu0
    %v1776 = vadd.f32 0.0, %v1775
    %1777 = vdwg.mxu0
    %v1780 = vrot.slane %v1770, 2
    %v1781 = vrot.slane %v1772, 2
    %v1784 = vrot.slane %v1770, 4
    %v1785 = vrot.slane %v1772, 4
    %v1788 = vrot.slane %v1770, 6
    %v1789 = vrot.slane %v1772, 6
    %v1794 = vrot.slane %v1774, 2
    %v1795 = vrot.slane %v1776, 2
    %v1798 = vpack.c.bf16 %v1770, %v1770
    %v1799 = vpack.c.bf16 %v1772, %v1772
    %v1800 = vpack.c.bf16 %v1780, %v1780
    %v1801 = vpack.c.bf16 %v1781, %v1781
    %v1802 = vpack.c.bf16 %v1784, %v1784
    %v1803 = vpack.c.bf16 %v1785, %v1785
    %v1804 = vpack.c.bf16 %v1788, %v1788
    %v1805 = vpack.c.bf16 %v1789, %v1789
    %v1806 = vpack.c.bf16 %v1774, %v1774
    %v1807 = vpack.c.bf16 %v1776, %v1776
    %v1808 = vpack.c.bf16 %v1794, %v1794
    %v1809 = vpack.c.bf16 %v1795, %v1795
    %v1810 = vld [vmem:[%s7] sm:$0xf]
    %v1811 = vld [vmem:[%s7 + $0x4] sm:$0xf]
    %v1812 = vld [vmem:[%s7 + $0x8] sm:$0xf]
    %v1813 = vld [vmem:[%s7 + $0xc] sm:$0xf]
    %v1814 = vld [vmem:[%s7 + $0x10] sm:$0xf]
    %v1815 = vld [vmem:[%s7 + $0x14] sm:$0xf]
    %v1816 = vld [vmem:[%s7 + $0x18] sm:$0xf]
    %v1817 = vld [vmem:[%s7 + $0x1c] sm:$0xf]
    %v1818 = vld [vmem:[%s7 + $0x20] sm:$0xf]
    %v1819 = vld [vmem:[%s7 + $0x24] sm:$0xf]
    %v1820 = vld [vmem:[%s7 + $0x28] sm:$0xf]
    %v1821 = vld [vmem:[%s7 + $0x2c] sm:$0xf]
    %v1822 = vld [vmem:[%s7 + $0x30] sm:$0xf]
    %v1823 = vld [vmem:[%s7 + $0x34] sm:$0xf]
    %v1824 = vld [vmem:[%s7 + $0x38] sm:$0xf]
    %v1825 = vld [vmem:[%s7 + $0x3c] sm:$0xf]
    %v1826 = vld [vmem:[%s7 + $0x40] sm:$0xf]
    %v1827 = vld [vmem:[%s7 + $0x44] sm:$0xf]
    %v1828 = vld [vmem:[%s7 + $0x48] sm:$0xf]
    %v1829 = vld [vmem:[%s7 + $0x4c] sm:$0xf]
    %v1830 = vld [vmem:[%s7 + $0x50] sm:$0xf]
    %v1831 = vld [vmem:[%s7 + $0x54] sm:$0xf]
    %v1832 = vld [vmem:[%s7 + $0x58] sm:$0xf]
    %v1833 = vld [vmem:[%s7 + $0x5c] sm:$0xf]
    %v1834 = vld [vmem:[%s7 + $0x60] sm:$0xf]
    %v1835 = vld [vmem:[%s7 + $0x64] sm:$0xf]
    %v1836 = vld [vmem:[%s7 + $0x68] sm:$0xf]
    %v1837 = vld [vmem:[%s7 + $0x6c] sm:$0xf]
    %v1838 = vld [vmem:[%s7 + $0x70] sm:$0xf]
    %v1839 = vld [vmem:[%s7 + $0x74] sm:$0xf]
    %v1840 = vld [vmem:[%s7 + $0x78] sm:$0xf]
    %v1841 = vld [vmem:[%s7 + $0x7c] sm:$0xf]
    %v1842 = vld [vmem:[%s7 + $0x80] sm:$0xf]
    %v1843 = vld [vmem:[%s7 + $0x84] sm:$0xf]
    %v1844 = vld [vmem:[%s7 + $0x88] sm:$0xf]
    %v1845 = vld [vmem:[%s7 + $0x8c] sm:$0xf]
    %v1846 = vld [vmem:[%s7 + $0x90] sm:$0xf]
    %v1847 = vld [vmem:[%s7 + $0x94] sm:$0xf]
    %v1848 = vld [vmem:[%s7 + $0x98] sm:$0xf]
    %v1849 = vld [vmem:[%s7 + $0x9c] sm:$0xf]
    %v1850 = vld [vmem:[%s7 + $0xa0] sm:$0xf]
    %v1851 = vld [vmem:[%s7 + $0xa4] sm:$0xf]
    %v1852 = vld [vmem:[%s7 + $0xa8] sm:$0xf]
    %v1853 = vld [vmem:[%s7 + $0xac] sm:$0xf]
    %v1854 = vld [vmem:[%s7 + $0xb0] sm:$0xf]
    %v1855 = vld [vmem:[%s7 + $0xb4] sm:$0xf]
    %v1856 = vld [vmem:[%s7 + $0xb8] sm:$0xf]
    %v1857 = vld [vmem:[%s7 + $0xbc] sm:$0xf]
    %v1858 = vld [vmem:[%s7 + $0xc0] sm:$0xf]
    %v1859 = vld [vmem:[%s7 + $0xc4] sm:$0xf]
    %v1860 = vld [vmem:[%s7 + $0xc8] sm:$0xf]
    %v1861 = vld [vmem:[%s7 + $0xcc] sm:$0xf]
    %v1862 = vld [vmem:[%s7 + $0xd0] sm:$0xf]
    %v1863 = vld [vmem:[%s7 + $0xd4] sm:$0xf]
    %v1864 = vld [vmem:[%s7 + $0xd8] sm:$0xf]
    %v1865 = vld [vmem:[%s7 + $0xdc] sm:$0xf]
    %v1866 = vld [vmem:[%s7 + $0xe0] sm:$0xf]
    %v1867 = vld [vmem:[%s7 + $0xe4] sm:$0xf]
    %v1868 = vld [vmem:[%s7 + $0xe8] sm:$0xf]
    %v1869 = vld [vmem:[%s7 + $0xec] sm:$0xf]
    %v1870 = vld [vmem:[%s7 + $0xf0] sm:$0xf]
    %v1871 = vld [vmem:[%s7 + $0xf4] sm:$0xf]
    %v1872 = vld [vmem:[%s7 + $0xf8] sm:$0xf]
    %v1873 = vld [vmem:[%s7 + $0xfc] sm:$0xf]
    %v1874 = vld [vmem:[%s7 + $0x100] sm:$0xf]
    %v1875 = vld [vmem:[%s7 + $0x104] sm:$0xf]
    %v1876 = vld [vmem:[%s7 + $0x108] sm:$0xf]
    %v1877 = vld [vmem:[%s7 + $0x10c] sm:$0xf]
    %v1878 = vld [vmem:[%s7 + $0x110] sm:$0xf]
    %v1879 = vld [vmem:[%s7 + $0x114] sm:$0xf]
    %v1880 = vld [vmem:[%s7 + $0x118] sm:$0xf]
    %v1881 = vld [vmem:[%s7 + $0x11c] sm:$0xf]
    %v1882 = vld [vmem:[%s7 + $0x120] sm:$0xf]
    %v1883 = vld [vmem:[%s7 + $0x124] sm:$0xf]
    %v1884 = vld [vmem:[%s7 + $0x128] sm:$0xf]
    %v1885 = vld [vmem:[%s7 + $0x12c] sm:$0xf]
    %v1886 = vld [vmem:[%s7 + $0x130] sm:$0xf]
    %v1887 = vld [vmem:[%s7 + $0x134] sm:$0xf]
    %v1888 = vld [vmem:[%s7 + $0x138] sm:$0xf]
    %v1889 = vld [vmem:[%s7 + $0x13c] sm:$0xf]
    %v1890 = vld [vmem:[%s7 + $0x140] sm:$0xf]
    %v1891 = vld [vmem:[%s7 + $0x144] sm:$0xf]
    %v1892 = vld [vmem:[%s7 + $0x148] sm:$0xf]
    %v1893 = vld [vmem:[%s7 + $0x14c] sm:$0xf]
    %v1894 = vld [vmem:[%s7 + $0x150] sm:$0xf]
    %v1895 = vld [vmem:[%s7 + $0x154] sm:$0xf]
    %v1896 = vld [vmem:[%s7 + $0x158] sm:$0xf]
    %v1897 = vld [vmem:[%s7 + $0x15c] sm:$0xf]
    %v1898 = vld [vmem:[%s7 + $0x160] sm:$0xf]
    %v1899 = vld [vmem:[%s7 + $0x164] sm:$0xf]
    %v1900 = vld [vmem:[%s7 + $0x168] sm:$0xf]
    %v1901 = vld [vmem:[%s7 + $0x16c] sm:$0xf]
    %v1902 = vld [vmem:[%s7 + $0x170] sm:$0xf]
    %v1903 = vld [vmem:[%s7 + $0x174] sm:$0xf]
    %v1904 = vld [vmem:[%s7 + $0x178] sm:$0xf]
    %v1905 = vld [vmem:[%s7 + $0x17c] sm:$0xf]
    %v1906 = vld [vmem:[%s7 + $0x180] sm:$0xf]
    %v1907 = vld [vmem:[%s7 + $0x184] sm:$0xf]
    %v1908 = vld [vmem:[%s7 + $0x188] sm:$0xf]
    %v1909 = vld [vmem:[%s7 + $0x18c] sm:$0xf]
    %v1910 = vld [vmem:[%s7 + $0x190] sm:$0xf]
    %v1911 = vld [vmem:[%s7 + $0x194] sm:$0xf]
    %v1912 = vld [vmem:[%s7 + $0x198] sm:$0xf]
    %v1913 = vld [vmem:[%s7 + $0x19c] sm:$0xf]
    %v1914 = vld [vmem:[%s7 + $0x1a0] sm:$0xf]
    %v1915 = vld [vmem:[%s7 + $0x1a4] sm:$0xf]
    %v1916 = vld [vmem:[%s7 + $0x1a8] sm:$0xf]
    %v1917 = vld [vmem:[%s7 + $0x1ac] sm:$0xf]
    %v1918 = vld [vmem:[%s7 + $0x1b0] sm:$0xf]
    %v1919 = vld [vmem:[%s7 + $0x1b4] sm:$0xf]
    %v1920 = vld [vmem:[%s7 + $0x1b8] sm:$0xf]
    %v1921 = vld [vmem:[%s7 + $0x1bc] sm:$0xf]
    %v1922 = vld [vmem:[%s7 + $0x1c0] sm:$0xf]
    %v1923 = vld [vmem:[%s7 + $0x1c4] sm:$0xf]
    %v1924 = vld [vmem:[%s7 + $0x1c8] sm:$0xf]
    %v1925 = vld [vmem:[%s7 + $0x1cc] sm:$0xf]
    %v1926 = vld [vmem:[%s7 + $0x1d0] sm:$0xf]
    %v1927 = vld [vmem:[%s7 + $0x1d4] sm:$0xf]
    %v1928 = vld [vmem:[%s7 + $0x1d8] sm:$0xf]
    %v1929 = vld [vmem:[%s7 + $0x1dc] sm:$0xf]
    %v1930 = vld [vmem:[%s7 + $0x1e0] sm:$0xf]
    %v1931 = vld [vmem:[%s7 + $0x1e4] sm:$0xf]
    %v1932 = vld [vmem:[%s7 + $0x1e8] sm:$0xf]
    %v1933 = vld [vmem:[%s7 + $0x1ec] sm:$0xf]
    %v1934 = vld [vmem:[%s7 + $0x1f0] sm:$0xf]
    %v1935 = vld [vmem:[%s7 + $0x1f4] sm:$0xf]
    %v1936 = vld [vmem:[%s7 + $0x1f8] sm:$0xf]
    %v1937 = vld [vmem:[%s7 + $0x1fc] sm:$0xf]
    %v1938 = vld [vmem:[%s7 + $0x200] sm:$0xf]
    %v1939 = vld [vmem:[%s7 + $0x204] sm:$0xf]
    %v1940 = vld [vmem:[%s7 + $0x208] sm:$0xf]
    %v1941 = vld [vmem:[%s7 + $0x20c] sm:$0xf]
    %v1942 = vld [vmem:[%s7 + $0x210] sm:$0xf]
    %v1943 = vld [vmem:[%s7 + $0x214] sm:$0xf]
    %v1944 = vld [vmem:[%s7 + $0x218] sm:$0xf]
    %v1945 = vld [vmem:[%s7 + $0x21c] sm:$0xf]
    %v1946 = vld [vmem:[%s7 + $0x220] sm:$0xf]
    %v1947 = vld [vmem:[%s7 + $0x224] sm:$0xf]
    %v1948 = vld [vmem:[%s7 + $0x228] sm:$0xf]
    %v1949 = vld [vmem:[%s7 + $0x22c] sm:$0xf]
    %v1950 = vld [vmem:[%s7 + $0x230] sm:$0xf]
    %v1951 = vld [vmem:[%s7 + $0x234] sm:$0xf]
    %v1952 = vld [vmem:[%s7 + $0x238] sm:$0xf]
    %v1953 = vld [vmem:[%s7 + $0x23c] sm:$0xf]
    %v1954 = vld [vmem:[%s7 + $0x240] sm:$0xf]
    %v1955 = vld [vmem:[%s7 + $0x244] sm:$0xf]
    %v1956 = vld [vmem:[%s7 + $0x248] sm:$0xf]
    %v1957 = vld [vmem:[%s7 + $0x24c] sm:$0xf]
    %v1958 = vld [vmem:[%s7 + $0x250] sm:$0xf]
    %v1959 = vld [vmem:[%s7 + $0x254] sm:$0xf]
    %v1960 = vld [vmem:[%s7 + $0x258] sm:$0xf]
    %v1961 = vld [vmem:[%s7 + $0x25c] sm:$0xf]
    %v1962 = vld [vmem:[%s7 + $0x260] sm:$0xf]
    %v1963 = vld [vmem:[%s7 + $0x264] sm:$0xf]
    %v1964 = vld [vmem:[%s7 + $0x268] sm:$0xf]
    %v1965 = vld [vmem:[%s7 + $0x26c] sm:$0xf]
    %v1966 = vld [vmem:[%s7 + $0x270] sm:$0xf]
    %v1967 = vld [vmem:[%s7 + $0x274] sm:$0xf]
    %v1968 = vld [vmem:[%s7 + $0x278] sm:$0xf]
    %v1969 = vld [vmem:[%s7 + $0x27c] sm:$0xf]
    %v1970 = vld [vmem:[%s7 + $0x280] sm:$0xf]
    %v1971 = vld [vmem:[%s7 + $0x284] sm:$0xf]
    %v1972 = vld [vmem:[%s7 + $0x288] sm:$0xf]
    %v1973 = vld [vmem:[%s7 + $0x28c] sm:$0xf]
    %v1974 = vld [vmem:[%s7 + $0x290] sm:$0xf]
    %v1975 = vld [vmem:[%s7 + $0x294] sm:$0xf]
    %v1976 = vld [vmem:[%s7 + $0x298] sm:$0xf]
    %v1977 = vld [vmem:[%s7 + $0x29c] sm:$0xf]
    %v1978 = vld [vmem:[%s7 + $0x2a0] sm:$0xf]
    %v1979 = vld [vmem:[%s7 + $0x2a4] sm:$0xf]
    %v1980 = vld [vmem:[%s7 + $0x2a8] sm:$0xf]
    %v1981 = vld [vmem:[%s7 + $0x2ac] sm:$0xf]
    %v1982 = vld [vmem:[%s7 + $0x2b0] sm:$0xf]
    %v1983 = vld [vmem:[%s7 + $0x2b4] sm:$0xf]
    %v1984 = vld [vmem:[%s7 + $0x2b8] sm:$0xf]
    %v1985 = vld [vmem:[%s7 + $0x2bc] sm:$0xf]
    %v1986 = vld [vmem:[%s7 + $0x2c0] sm:$0xf]
    %v1987 = vld [vmem:[%s7 + $0x2c4] sm:$0xf]
    %v1988 = vld [vmem:[%s7 + $0x2c8] sm:$0xf]
    %v1989 = vld [vmem:[%s7 + $0x2cc] sm:$0xf]
    %v1990 = vld [vmem:[%s7 + $0x2d0] sm:$0xf]
    %v1991 = vld [vmem:[%s7 + $0x2d4] sm:$0xf]
    %v1992 = vld [vmem:[%s7 + $0x2d8] sm:$0xf]
    %v1993 = vld [vmem:[%s7 + $0x2dc] sm:$0xf]
    %v1994 = vld [vmem:[%s7 + $0x2e0] sm:$0xf]
    %v1995 = vld [vmem:[%s7 + $0x2e4] sm:$0xf]
    %v1996 = vld [vmem:[%s7 + $0x2e8] sm:$0xf]
    %v1997 = vld [vmem:[%s7 + $0x2ec] sm:$0xf]
    %v1998 = vld [vmem:[%s7 + $0x2f0] sm:$0xf]
    %v1999 = vld [vmem:[%s7 + $0x2f4] sm:$0xf]
    %v2000 = vld [vmem:[%s7 + $0x2f8] sm:$0xf]
    %v2001 = vld [vmem:[%s7 + $0x2fc] sm:$0xf]
    %v2002 = vld [vmem:[%s8] sm:$0x1]
    %v2004 = vlaneseq
    %v2005 = vshrl.u32 %v2004, 7
    %v2006 = vsub.s32 0, %v2005
    %v2007 = vrot.slane %v2002, %v2006
    %v2201 = vunpack.c.l.b16 %v1810
    %v2202 = vunpack.c.l.b16 %v1811
    %v2203 = vunpack.c.l.b16 %v1812
    %v2204 = vunpack.c.l.b16 %v1813
    %v2205 = vunpack.c.l.b16 %v1814
    %v2206 = vunpack.c.l.b16 %v1815
    %v2207 = vunpack.c.l.b16 %v1816
    %v2208 = vunpack.c.l.b16 %v1817
    %v2209 = vunpack.c.l.b16 %v1818
    %v2210 = vunpack.c.l.b16 %v1819
    %v2211 = vunpack.c.l.b16 %v1820
    %v2212 = vunpack.c.l.b16 %v1821
    %v2213 = vunpack.c.l.b16 %v1822
    %v2214 = vunpack.c.l.b16 %v1823
    %v2215 = vunpack.c.l.b16 %v1824
    %v2216 = vunpack.c.l.b16 %v1825
    %v2217 = vunpack.c.l.b16 %v1826
    %v2218 = vunpack.c.l.b16 %v1827
    %v2219 = vunpack.c.l.b16 %v1828
    %v2220 = vunpack.c.l.b16 %v1829
    %v2221 = vunpack.c.l.b16 %v1830
    %v2222 = vunpack.c.l.b16 %v1831
    %v2223 = vunpack.c.l.b16 %v1832
    %v2224 = vunpack.c.l.b16 %v1833
    %v2225 = vunpack.c.l.b16 %v1834
    %v2226 = vunpack.c.l.b16 %v1835
    %v2227 = vunpack.c.l.b16 %v1836
    %v2228 = vunpack.c.l.b16 %v1837
    %v2229 = vunpack.c.l.b16 %v1838
    %v2230 = vunpack.c.l.b16 %v1839
    %v2231 = vunpack.c.l.b16 %v1840
    %v2232 = vunpack.c.l.b16 %v1841
    %v2233 = vunpack.c.l.b16 %v1842
    %v2234 = vunpack.c.l.b16 %v1843
    %v2235 = vunpack.c.l.b16 %v1844
    %v2236 = vunpack.c.l.b16 %v1845
    %v2237 = vunpack.c.l.b16 %v1846
    %v2238 = vunpack.c.l.b16 %v1847
    %v2239 = vunpack.c.l.b16 %v1848
    %v2240 = vunpack.c.l.b16 %v1849
    %v2241 = vunpack.c.l.b16 %v1850
    %v2242 = vunpack.c.l.b16 %v1851
    %v2243 = vunpack.c.l.b16 %v1852
    %v2244 = vunpack.c.l.b16 %v1853
    %v2245 = vunpack.c.l.b16 %v1854
    %v2246 = vunpack.c.l.b16 %v1855
    %v2247 = vunpack.c.l.b16 %v1856
    %v2248 = vunpack.c.l.b16 %v1857
    %v2249 = vunpack.c.l.b16 %v1858
    %v2250 = vunpack.c.l.b16 %v1859
    %v2251 = vunpack.c.l.b16 %v1860
    %v2252 = vunpack.c.l.b16 %v1861
    %v2253 = vunpack.c.l.b16 %v1862
    %v2254 = vunpack.c.l.b16 %v1863
    %v2255 = vunpack.c.l.b16 %v1864
    %v2256 = vunpack.c.l.b16 %v1865
    %v2257 = vunpack.c.l.b16 %v1866
    %v2258 = vunpack.c.l.b16 %v1867
    %v2259 = vunpack.c.l.b16 %v1868
    %v2260 = vunpack.c.l.b16 %v1869
    %v2261 = vunpack.c.l.b16 %v1870
    %v2262 = vunpack.c.l.b16 %v1871
    %v2263 = vunpack.c.l.b16 %v1872
    %v2264 = vunpack.c.l.b16 %v1873
    %v2265 = vunpack.c.l.b16 %v1874
    %v2266 = vunpack.c.l.b16 %v1875
    %v2267 = vunpack.c.l.b16 %v1876
    %v2268 = vunpack.c.l.b16 %v1877
    %v2269 = vunpack.c.l.b16 %v1878
    %v2270 = vunpack.c.l.b16 %v1879
    %v2271 = vunpack.c.l.b16 %v1880
    %v2272 = vunpack.c.l.b16 %v1881
    %v2273 = vunpack.c.l.b16 %v1882
    %v2274 = vunpack.c.l.b16 %v1883
    %v2275 = vunpack.c.l.b16 %v1884
    %v2276 = vunpack.c.l.b16 %v1885
    %v2277 = vunpack.c.l.b16 %v1886
    %v2278 = vunpack.c.l.b16 %v1887
    %v2279 = vunpack.c.l.b16 %v1888
    %v2280 = vunpack.c.l.b16 %v1889
    %v2281 = vunpack.c.l.b16 %v1890
    %v2282 = vunpack.c.l.b16 %v1891
    %v2283 = vunpack.c.l.b16 %v1892
    %v2284 = vunpack.c.l.b16 %v1893
    %v2285 = vunpack.c.l.b16 %v1894
    %v2286 = vunpack.c.l.b16 %v1895
    %v2287 = vunpack.c.l.b16 %v1896
    %v2288 = vunpack.c.l.b16 %v1897
    %v2289 = vunpack.c.l.b16 %v1898
    %v2290 = vunpack.c.l.b16 %v1899
    %v2291 = vunpack.c.l.b16 %v1900
    %v2292 = vunpack.c.l.b16 %v1901
    %v2293 = vunpack.c.l.b16 %v1902
    %v2294 = vunpack.c.l.b16 %v1903
    %v2295 = vunpack.c.l.b16 %v1904
    %v2296 = vunpack.c.l.b16 %v1905
    %v2297 = vunpack.c.l.b16 %v1906
    %v2298 = vunpack.c.l.b16 %v1907
    %v2299 = vunpack.c.l.b16 %v1908
    %v2300 = vunpack.c.l.b16 %v1909
    %v2301 = vunpack.c.l.b16 %v1910
    %v2302 = vunpack.c.l.b16 %v1911
    %v2303 = vunpack.c.l.b16 %v1912
    %v2304 = vunpack.c.l.b16 %v1913
    %v2305 = vunpack.c.l.b16 %v1914
    %v2306 = vunpack.c.l.b16 %v1915
    %v2307 = vunpack.c.l.b16 %v1916
    %v2308 = vunpack.c.l.b16 %v1917
    %v2309 = vunpack.c.l.b16 %v1918
    %v2310 = vunpack.c.l.b16 %v1919
    %v2311 = vunpack.c.l.b16 %v1920
    %v2312 = vunpack.c.l.b16 %v1921
    %v2313 = vunpack.c.l.b16 %v1922
    %v2314 = vunpack.c.l.b16 %v1923
    %v2315 = vunpack.c.l.b16 %v1924
    %v2316 = vunpack.c.l.b16 %v1925
    %v2317 = vunpack.c.l.b16 %v1926
    %v2318 = vunpack.c.l.b16 %v1927
    %v2319 = vunpack.c.l.b16 %v1928
    %v2320 = vunpack.c.l.b16 %v1929
    %v2321 = vunpack.c.l.b16 %v1930
    %v2322 = vunpack.c.l.b16 %v1931
    %v2323 = vunpack.c.l.b16 %v1932
    %v2324 = vunpack.c.l.b16 %v1933
    %v2325 = vunpack.c.l.b16 %v1934
    %v2326 = vunpack.c.l.b16 %v1935
    %v2327 = vunpack.c.l.b16 %v1936
    %v2328 = vunpack.c.l.b16 %v1937
    %v2329 = vunpack.c.l.b16 %v1938
    %v2330 = vunpack.c.l.b16 %v1939
    %v2331 = vunpack.c.l.b16 %v1940
    %v2332 = vunpack.c.l.b16 %v1941
    %v2333 = vunpack.c.l.b16 %v1942
    %v2334 = vunpack.c.l.b16 %v1943
    %v2335 = vunpack.c.l.b16 %v1944
    %v2336 = vunpack.c.l.b16 %v1945
    %v2337 = vunpack.c.l.b16 %v1946
    %v2338 = vunpack.c.l.b16 %v1947
    %v2339 = vunpack.c.l.b16 %v1948
    %v2340 = vunpack.c.l.b16 %v1949
    %v2341 = vunpack.c.l.b16 %v1950
    %v2342 = vunpack.c.l.b16 %v1951
    %v2343 = vunpack.c.l.b16 %v1952
    %v2344 = vunpack.c.l.b16 %v1953
    %v2345 = vunpack.c.l.b16 %v1954
    %v2346 = vunpack.c.l.b16 %v1955
    %v2347 = vunpack.c.l.b16 %v1956
    %v2348 = vunpack.c.l.b16 %v1957
    %v2349 = vunpack.c.l.b16 %v1958
    %v2350 = vunpack.c.l.b16 %v1959
    %v2351 = vunpack.c.l.b16 %v1960
    %v2352 = vunpack.c.l.b16 %v1961
    %v2353 = vunpack.c.l.b16 %v1962
    %v2354 = vunpack.c.l.b16 %v1963
    %v2355 = vunpack.c.l.b16 %v1964
    %v2356 = vunpack.c.l.b16 %v1965
    %v2357 = vunpack.c.l.b16 %v1966
    %v2358 = vunpack.c.l.b16 %v1967
    %v2359 = vunpack.c.l.b16 %v1968
    %v2360 = vunpack.c.l.b16 %v1969
    %v2361 = vunpack.c.l.b16 %v1970
    %v2362 = vunpack.c.l.b16 %v1971
    %v2363 = vunpack.c.l.b16 %v1972
    %v2364 = vunpack.c.l.b16 %v1973
    %v2365 = vunpack.c.l.b16 %v1974
    %v2366 = vunpack.c.l.b16 %v1975
    %v2367 = vunpack.c.l.b16 %v1976
    %v2368 = vunpack.c.l.b16 %v1977
    %v2369 = vunpack.c.l.b16 %v1978
    %v2370 = vunpack.c.l.b16 %v1979
    %v2371 = vunpack.c.l.b16 %v1980
    %v2372 = vunpack.c.l.b16 %v1981
    %v2373 = vunpack.c.l.b16 %v1982
    %v2374 = vunpack.c.l.b16 %v1983
    %v2375 = vunpack.c.l.b16 %v1984
    %v2376 = vunpack.c.l.b16 %v1985
    %v2377 = vunpack.c.l.b16 %v1986
    %v2378 = vunpack.c.l.b16 %v1987
    %v2379 = vunpack.c.l.b16 %v1988
    %v2380 = vunpack.c.l.b16 %v1989
    %v2381 = vunpack.c.l.b16 %v1990
    %v2382 = vunpack.c.l.b16 %v1991
    %v2383 = vunpack.c.l.b16 %v1992
    %v2384 = vunpack.c.l.b16 %v1993
    %v2385 = vunpack.c.l.b16 %v1994
    %v2386 = vunpack.c.l.b16 %v1995
    %v2387 = vunpack.c.l.b16 %v1996
    %v2388 = vunpack.c.l.b16 %v1997
    %v2389 = vunpack.c.l.b16 %v1998
    %v2390 = vunpack.c.l.b16 %v1999
    %v2391 = vunpack.c.l.b16 %v2000
    %v2392 = vunpack.c.l.b16 %v2001
    %v2393 = vpack.c.b16 %v2202, %v2201
    %v2394 = vpack.c.b16 %v2204, %v2203
    %v2395 = vpack.c.b16 %v2206, %v2205
    %v2396 = vpack.c.b16 %v2208, %v2207
    %v2397 = vpack.c.b16 %v2210, %v2209
    %v2398 = vpack.c.b16 %v2212, %v2211
    %v2399 = vpack.c.b16 %v2214, %v2213
    %v2400 = vpack.c.b16 %v2216, %v2215
    %v2401 = vpack.c.b16 %v2218, %v2217
    %v2402 = vpack.c.b16 %v2220, %v2219
    %v2403 = vpack.c.b16 %v2222, %v2221
    %v2404 = vpack.c.b16 %v2224, %v2223
    %v2405 = vpack.c.b16 %v2226, %v2225
    %v2406 = vpack.c.b16 %v2228, %v2227
    %v2407 = vpack.c.b16 %v2230, %v2229
    %v2408 = vpack.c.b16 %v2232, %v2231
    %v2409 = vpack.c.b16 %v2234, %v2233
    %v2410 = vpack.c.b16 %v2236, %v2235
    %v2411 = vpack.c.b16 %v2238, %v2237
    %v2412 = vpack.c.b16 %v2240, %v2239
    %v2413 = vpack.c.b16 %v2242, %v2241
    %v2414 = vpack.c.b16 %v2244, %v2243
    %v2415 = vpack.c.b16 %v2246, %v2245
    %v2416 = vpack.c.b16 %v2248, %v2247
    %v2417 = vpack.c.b16 %v2250, %v2249
    %v2418 = vpack.c.b16 %v2252, %v2251
    %v2419 = vpack.c.b16 %v2254, %v2253
    %v2420 = vpack.c.b16 %v2256, %v2255
    %v2421 = vpack.c.b16 %v2258, %v2257
    %v2422 = vpack.c.b16 %v2260, %v2259
    %v2423 = vpack.c.b16 %v2262, %v2261
    %v2424 = vpack.c.b16 %v2264, %v2263
    %v2425 = vpack.c.b16 %v2266, %v2265
    %v2426 = vpack.c.b16 %v2268, %v2267
    %v2427 = vpack.c.b16 %v2270, %v2269
    %v2428 = vpack.c.b16 %v2272, %v2271
    %v2429 = vpack.c.b16 %v2274, %v2273
    %v2430 = vpack.c.b16 %v2276, %v2275
    %v2431 = vpack.c.b16 %v2278, %v2277
    %v2432 = vpack.c.b16 %v2280, %v2279
    %v2433 = vpack.c.b16 %v2282, %v2281
    %v2434 = vpack.c.b16 %v2284, %v2283
    %v2435 = vpack.c.b16 %v2286, %v2285
    %v2436 = vpack.c.b16 %v2288, %v2287
    %v2437 = vpack.c.b16 %v2290, %v2289
    %v2438 = vpack.c.b16 %v2292, %v2291
    %v2439 = vpack.c.b16 %v2294, %v2293
    %v2440 = vpack.c.b16 %v2296, %v2295
    %v2441 = vpack.c.b16 %v2298, %v2297
    %v2442 = vpack.c.b16 %v2300, %v2299
    %v2443 = vpack.c.b16 %v2302, %v2301
    %v2444 = vpack.c.b16 %v2304, %v2303
    %v2445 = vpack.c.b16 %v2306, %v2305
    %v2446 = vpack.c.b16 %v2308, %v2307
    %v2447 = vpack.c.b16 %v2310, %v2309
    %v2448 = vpack.c.b16 %v2312, %v2311
    %v2449 = vpack.c.b16 %v2314, %v2313
    %v2450 = vpack.c.b16 %v2316, %v2315
    %v2451 = vpack.c.b16 %v2318, %v2317
    %v2452 = vpack.c.b16 %v2320, %v2319
    %v2453 = vpack.c.b16 %v2322, %v2321
    %v2454 = vpack.c.b16 %v2324, %v2323
    %v2455 = vpack.c.b16 %v2326, %v2325
    %v2456 = vpack.c.b16 %v2328, %v2327
    %v2457 = vpack.c.b16 %v2330, %v2329
    %v2458 = vpack.c.b16 %v2332, %v2331
    %v2459 = vpack.c.b16 %v2334, %v2333
    %v2460 = vpack.c.b16 %v2336, %v2335
    %v2461 = vpack.c.b16 %v2338, %v2337
    %v2462 = vpack.c.b16 %v2340, %v2339
    %v2463 = vpack.c.b16 %v2342, %v2341
    %v2464 = vpack.c.b16 %v2344, %v2343
    %v2465 = vpack.c.b16 %v2346, %v2345
    %v2466 = vpack.c.b16 %v2348, %v2347
    %v2467 = vpack.c.b16 %v2350, %v2349
    %v2468 = vpack.c.b16 %v2352, %v2351
    %v2469 = vpack.c.b16 %v2354, %v2353
    %v2470 = vpack.c.b16 %v2356, %v2355
    %v2471 = vpack.c.b16 %v2358, %v2357
    %v2472 = vpack.c.b16 %v2360, %v2359
    %v2473 = vpack.c.b16 %v2362, %v2361
    %v2474 = vpack.c.b16 %v2364, %v2363
    %v2475 = vpack.c.b16 %v2366, %v2365
    %v2476 = vpack.c.b16 %v2368, %v2367
    %v2477 = vpack.c.b16 %v2370, %v2369
    %v2478 = vpack.c.b16 %v2372, %v2371
    %v2479 = vpack.c.b16 %v2374, %v2373
    %v2480 = vpack.c.b16 %v2376, %v2375
    %v2481 = vpack.c.b16 %v2378, %v2377
    %v2482 = vpack.c.b16 %v2380, %v2379
    %v2483 = vpack.c.b16 %v2382, %v2381
    %v2484 = vpack.c.b16 %v2384, %v2383
    %v2485 = vpack.c.b16 %v2386, %v2385
    %v2486 = vpack.c.b16 %v2388, %v2387
    %v2487 = vpack.c.b16 %v2390, %v2389
    %v2488 = vpack.c.b16 %v2392, %v2391
    %2585 = vmatprep.subr.bf16.mxu0 0
    %2586 = vmatpush1.bf16.msra.mxu0 %v2393
    %2587 = vmatprep.subr.bf16.mxu0 0
    %2588 = vmatpush1.bf16.msra.mxu0 %v2394
    %2589 = vmatprep.subr.bf16.mxu0 0
    %2590 = vmatpush1.bf16.msra.mxu0 %v2395
    %2591 = vmatprep.subr.bf16.mxu0 0
    %2592 = vmatpush1.bf16.msra.mxu0 %v2396
    %2593 = vmatprep.subr.bf16.mxu0 0
    %2594 = vmatpush1.bf16.msra.mxu0 %v2397
    %2595 = vmatprep.subr.bf16.mxu0 0
    %2596 = vmatpush1.bf16.msra.mxu0 %v2398
    %2597 = vmatprep.subr.bf16.mxu0 0
    %2598 = vmatpush1.bf16.msra.mxu0 %v2399
    %2599 = vmatprep.subr.bf16.mxu0 0
    %2600 = vmatpush1.bf16.msra.mxu0 %v2400
    %2601 = vmatprep.subr.bf16.mxu0 0
    %2602 = vmatpush1.bf16.msra.mxu0 %v2401
    %2603 = vmatprep.subr.bf16.mxu0 0
    %2604 = vmatpush1.bf16.msra.mxu0 %v2402
    %2605 = vmatprep.subr.bf16.mxu0 0
    %2606 = vmatpush1.bf16.msra.mxu0 %v2403
    %2607 = vmatprep.subr.bf16.mxu0 0
    %2608 = vmatpush1.bf16.msra.mxu0 %v2404
    %2609 = vmatprep.subr.bf16.mxu0 0
    %2610 = vmatpush1.bf16.msra.mxu0 %v2405
    %2611 = vmatprep.subr.bf16.mxu0 0
    %2612 = vmatpush1.bf16.msra.mxu0 %v2406
    %2613 = vmatprep.subr.bf16.mxu0 0
    %2614 = vmatpush1.bf16.msra.mxu0 %v2407
    %2615 = vmatprep.subr.bf16.mxu0 0
    %2616 = vmatpush1.bf16.msra.mxu0 %v2408
    %2617 = vmatprep.mubr.bf16.mxu0 %v1799
    %2618 = vmatmul.mubr.bf16.gmra.mrb[0].mxu0 %v1798
    %v2619 = vpop.f32.mrb[0].mxu0
    %v2620 = vadd.f32 %v2007, %v2619
    %v2621 = vpop.f32.mrb[0].mxu0
    %v2622 = vpop.f32.mrb[0].mxu0
    %v2623 = vpop.f32.mrb[0].mxu0
    %2624 = vdwg.mxu0
    %2625 = vmatprep.subr.bf16.mxu0 0
    %2626 = vmatpush1.bf16.msra.mxu0 %v2409
    %2627 = vmatprep.subr.bf16.mxu0 0
    %2628 = vmatpush1.bf16.msra.mxu0 %v2410
    %2629 = vmatprep.subr.bf16.mxu0 0
    %2630 = vmatpush1.bf16.msra.mxu0 %v2411
    %2631 = vmatprep.subr.bf16.mxu0 0
    %2632 = vmatpush1.bf16.msra.mxu0 %v2412
    %2633 = vmatprep.subr.bf16.mxu0 0
    %2634 = vmatpush1.bf16.msra.mxu0 %v2413
    %2635 = vmatprep.subr.bf16.mxu0 0
    %2636 = vmatpush1.bf16.msra.mxu0 %v2414
    %2637 = vmatprep.subr.bf16.mxu0 0
    %2638 = vmatpush1.bf16.msra.mxu0 %v2415
    %2639 = vmatprep.subr.bf16.mxu0 0
    %2640 = vmatpush1.bf16.msra.mxu0 %v2416
    %2641 = vmatprep.subr.bf16.mxu0 0
    %2642 = vmatpush1.bf16.msra.mxu0 %v2417
    %2643 = vmatprep.subr.bf16.mxu0 0
    %2644 = vmatpush1.bf16.msra.mxu0 %v2418
    %2645 = vmatprep.subr.bf16.mxu0 0
    %2646 = vmatpush1.bf16.msra.mxu0 %v2419
    %2647 = vmatprep.subr.bf16.mxu0 0
    %2648 = vmatpush1.bf16.msra.mxu0 %v2420
    %2649 = vmatprep.subr.bf16.mxu0 0
    %2650 = vmatpush1.bf16.msra.mxu0 %v2421
    %2651 = vmatprep.subr.bf16.mxu0 0
    %2652 = vmatpush1.bf16.msra.mxu0 %v2422
    %2653 = vmatprep.subr.bf16.mxu0 0
    %2654 = vmatpush1.bf16.msra.mxu0 %v2423
    %2655 = vmatprep.subr.bf16.mxu0 0
    %2656 = vmatpush1.bf16.msra.mxu0 %v2424
    %2657 = vmatprep.mubr.bf16.mxu0 %v1801
    %2658 = vmatmul.mubr.bf16.gmra.mrb[0].mxu0 %v1800
    %v2659 = vpop.f32.mrb[0].mxu0
    %v2660 = vadd.f32 %v2620, %v2659
    %v2661 = vpop.f32.mrb[0].mxu0
    %v2662 = vpop.f32.mrb[0].mxu0
    %v2663 = vpop.f32.mrb[0].mxu0
    %2664 = vdwg.mxu0
    %2665 = vmatprep.subr.bf16.mxu0 0
    %2666 = vmatpush1.bf16.msra.mxu0 %v2425
    %2667 = vmatprep.subr.bf16.mxu0 0
    %2668 = vmatpush1.bf16.msra.mxu0 %v2426
    %2669 = vmatprep.subr.bf16.mxu0 0
    %2670 = vmatpush1.bf16.msra.mxu0 %v2427
    %2671 = vmatprep.subr.bf16.mxu0 0
    %2672 = vmatpush1.bf16.msra.mxu0 %v2428
    %2673 = vmatprep.subr.bf16.mxu0 0
    %2674 = vmatpush1.bf16.msra.mxu0 %v2429
    %2675 = vmatprep.subr.bf16.mxu0 0
    %2676 = vmatpush1.bf16.msra.mxu0 %v2430
    %2677 = vmatprep.subr.bf16.mxu0 0
    %2678 = vmatpush1.bf16.msra.mxu0 %v2431
    %2679 = vmatprep.subr.bf16.mxu0 0
    %2680 = vmatpush1.bf16.msra.mxu0 %v2432
    %2681 = vmatprep.subr.bf16.mxu0 0
    %2682 = vmatpush1.bf16.msra.mxu0 %v2433
    %2683 = vmatprep.subr.bf16.mxu0 0
    %2684 = vmatpush1.bf16.msra.mxu0 %v2434
    %2685 = vmatprep.subr.bf16.mxu0 0
    %2686 = vmatpush1.bf16.msra.mxu0 %v2435
    %2687 = vmatprep.subr.bf16.mxu0 0
    %2688 = vmatpush1.bf16.msra.mxu0 %v2436
    %2689 = vmatprep.subr.bf16.mxu0 0
    %2690 = vmatpush1.bf16.msra.mxu0 %v2437
    %2691 = vmatprep.subr.bf16.mxu0 0
    %2692 = vmatpush1.bf16.msra.mxu0 %v2438
    %2693 = vmatprep.subr.bf16.mxu0 0
    %2694 = vmatpush1.bf16.msra.mxu0 %v2439
    %2695 = vmatprep.subr.bf16.mxu0 0
    %2696 = vmatpush1.bf16.msra.mxu0 %v2440
    %2697 = vmatprep.mubr.bf16.mxu0 %v1803
    %2698 = vmatmul.mubr.bf16.gmra.mrb[0].mxu0 %v1802
    %v2699 = vpop.f32.mrb[0].mxu0
    %v2700 = vadd.f32 %v2660, %v2699
    %v2701 = vpop.f32.mrb[0].mxu0
    %v2702 = vpop.f32.mrb[0].mxu0
    %v2703 = vpop.f32.mrb[0].mxu0
    %2704 = vdwg.mxu0
    %2705 = vmatprep.subr.bf16.mxu0 0
    %2706 = vmatpush1.bf16.msra.mxu0 %v2441
    %2707 = vmatprep.subr.bf16.mxu0 0
    %2708 = vmatpush1.bf16.msra.mxu0 %v2442
    %2709 = vmatprep.subr.bf16.mxu0 0
    %2710 = vmatpush1.bf16.msra.mxu0 %v2443
    %2711 = vmatprep.subr.bf16.mxu0 0
    %2712 = vmatpush1.bf16.msra.mxu0 %v2444
    %2713 = vmatprep.subr.bf16.mxu0 0
    %2714 = vmatpush1.bf16.msra.mxu0 %v2445
    %2715 = vmatprep.subr.bf16.mxu0 0
    %2716 = vmatpush1.bf16.msra.mxu0 %v2446
    %2717 = vmatprep.subr.bf16.mxu0 0
    %2718 = vmatpush1.bf16.msra.mxu0 %v2447
    %2719 = vmatprep.subr.bf16.mxu0 0
    %2720 = vmatpush1.bf16.msra.mxu0 %v2448
    %2721 = vmatprep.subr.bf16.mxu0 0
    %2722 = vmatpush1.bf16.msra.mxu0 %v2449
    %2723 = vmatprep.subr.bf16.mxu0 0
    %2724 = vmatpush1.bf16.msra.mxu0 %v2450
    %2725 = vmatprep.subr.bf16.mxu0 0
    %2726 = vmatpush1.bf16.msra.mxu0 %v2451
    %2727 = vmatprep.subr.bf16.mxu0 0
    %2728 = vmatpush1.bf16.msra.mxu0 %v2452
    %2729 = vmatprep.subr.bf16.mxu0 0
    %2730 = vmatpush1.bf16.msra.mxu0 %v2453
    %2731 = vmatprep.subr.bf16.mxu0 0
    %2732 = vmatpush1.bf16.msra.mxu0 %v2454
    %2733 = vmatprep.subr.bf16.mxu0 0
    %2734 = vmatpush1.bf16.msra.mxu0 %v2455
    %2735 = vmatprep.subr.bf16.mxu0 0
    %2736 = vmatpush1.bf16.msra.mxu0 %v2456
    %2737 = vmatprep.mubr.bf16.mxu0 %v1805
    %2738 = vmatmul.mubr.bf16.gmra.mrb[0].mxu0 %v1804
    %v2739 = vpop.f32.mrb[0].mxu0
    %v2740 = vadd.f32 %v2700, %v2739
    %v2741 = vpop.f32.mrb[0].mxu0
    %v2742 = vpop.f32.mrb[0].mxu0
    %v2743 = vpop.f32.mrb[0].mxu0
    %2744 = vdwg.mxu0
    %2745 = vmatprep.subr.bf16.mxu0 0
    %2746 = vmatpush1.bf16.msra.mxu0 %v2457
    %2747 = vmatprep.subr.bf16.mxu0 0
    %2748 = vmatpush1.bf16.msra.mxu0 %v2458
    %2749 = vmatprep.subr.bf16.mxu0 0
    %2750 = vmatpush1.bf16.msra.mxu0 %v2459
    %2751 = vmatprep.subr.bf16.mxu0 0
    %2752 = vmatpush1.bf16.msra.mxu0 %v2460
    %2753 = vmatprep.subr.bf16.mxu0 0
    %2754 = vmatpush1.bf16.msra.mxu0 %v2461
    %2755 = vmatprep.subr.bf16.mxu0 0
    %2756 = vmatpush1.bf16.msra.mxu0 %v2462
    %2757 = vmatprep.subr.bf16.mxu0 0
    %2758 = vmatpush1.bf16.msra.mxu0 %v2463
    %2759 = vmatprep.subr.bf16.mxu0 0
    %2760 = vmatpush1.bf16.msra.mxu0 %v2464
    %2761 = vmatprep.subr.bf16.mxu0 0
    %2762 = vmatpush1.bf16.msra.mxu0 %v2465
    %2763 = vmatprep.subr.bf16.mxu0 0
    %2764 = vmatpush1.bf16.msra.mxu0 %v2466
    %2765 = vmatprep.subr.bf16.mxu0 0
    %2766 = vmatpush1.bf16.msra.mxu0 %v2467
    %2767 = vmatprep.subr.bf16.mxu0 0
    %2768 = vmatpush1.bf16.msra.mxu0 %v2468
    %2769 = vmatprep.subr.bf16.mxu0 0
    %2770 = vmatpush1.bf16.msra.mxu0 %v2469
    %2771 = vmatprep.subr.bf16.mxu0 0
    %2772 = vmatpush1.bf16.msra.mxu0 %v2470
    %2773 = vmatprep.subr.bf16.mxu0 0
    %2774 = vmatpush1.bf16.msra.mxu0 %v2471
    %2775 = vmatprep.subr.bf16.mxu0 0
    %2776 = vmatpush1.bf16.msra.mxu0 %v2472
    %2777 = vmatprep.mubr.bf16.mxu0 %v1807
    %2778 = vmatmul.mubr.bf16.gmra.mrb[0].mxu0 %v1806
    %v2779 = vpop.f32.mrb[0].mxu0
    %v2780 = vadd.f32 %v2740, %v2779
    %v2781 = vpop.f32.mrb[0].mxu0
    %v2782 = vpop.f32.mrb[0].mxu0
    %v2783 = vpop.f32.mrb[0].mxu0
    %2784 = vdwg.mxu0
    %2785 = vmatprep.subr.bf16.mxu0 0
    %2786 = vmatpush1.bf16.msra.mxu0 %v2473
    %2787 = vmatprep.subr.bf16.mxu0 0
    %2788 = vmatpush1.bf16.msra.mxu0 %v2474
    %2789 = vmatprep.subr.bf16.mxu0 0
    %2790 = vmatpush1.bf16.msra.mxu0 %v2475
    %2791 = vmatprep.subr.bf16.mxu0 0
    %2792 = vmatpush1.bf16.msra.mxu0 %v2476
    %2793 = vmatprep.subr.bf16.mxu0 0
    %2794 = vmatpush1.bf16.msra.mxu0 %v2477
    %2795 = vmatprep.subr.bf16.mxu0 0
    %2796 = vmatpush1.bf16.msra.mxu0 %v2478
    %2797 = vmatprep.subr.bf16.mxu0 0
    %2798 = vmatpush1.bf16.msra.mxu0 %v2479
    %2799 = vmatprep.subr.bf16.mxu0 0
    %2800 = vmatpush1.bf16.msra.mxu0 %v2480
    %2801 = vmatprep.subr.bf16.mxu0 0
    %2802 = vmatpush1.bf16.msra.mxu0 %v2481
    %2803 = vmatprep.subr.bf16.mxu0 0
    %2804 = vmatpush1.bf16.msra.mxu0 %v2482
    %2805 = vmatprep.subr.bf16.mxu0 0
    %2806 = vmatpush1.bf16.msra.mxu0 %v2483
    %2807 = vmatprep.subr.bf16.mxu0 0
    %2808 = vmatpush1.bf16.msra.mxu0 %v2484
    %2809 = vmatprep.subr.bf16.mxu0 0
    %2810 = vmatpush1.bf16.msra.mxu0 %v2485
    %2811 = vmatprep.subr.bf16.mxu0 0
    %2812 = vmatpush1.bf16.msra.mxu0 %v2486
    %2813 = vmatprep.subr.bf16.mxu0 0
    %2814 = vmatpush1.bf16.msra.mxu0 %v2487
    %2815 = vmatprep.subr.bf16.mxu0 0
    %2816 = vmatpush1.bf16.msra.mxu0 %v2488
    %2817 = vmatprep.mubr.bf16.mxu0 %v1809
    %2818 = vmatmul.mubr.bf16.gmra.mrb[0].mxu0 %v1808
    %v2819 = vpop.f32.mrb[0].mxu0
    %v2820 = vadd.f32 %v2780, %v2819
    %v2821 = vpop.f32.mrb[0].mxu0
    %v2822 = vpop.f32.mrb[0].mxu0
    %v2823 = vpop.f32.mrb[0].mxu0
    %2824 = vdwg.mxu0
    %v2825 = vmax.f32 %v2820, 0.0
    %v2826 = vpack.c.bf16 %v2825, %v2825
    %v2827 = vld [vmem:[%s9] sm:$0xf]
    %v2828 = vld [vmem:[%s9 + $0x4] sm:$0xf]
    %v2829 = vld [vmem:[%s9 + $0x8] sm:$0xf]
    %v2830 = vld [vmem:[%s9 + $0xc] sm:$0xf]
    %v2831 = vld [vmem:[%s9 + $0x10] sm:$0xf]
    %v2832 = vld [vmem:[%s9 + $0x14] sm:$0xf]
    %v2833 = vld [vmem:[%s9 + $0x18] sm:$0xf]
    %v2834 = vld [vmem:[%s9 + $0x1c] sm:$0xf]
    %v2835 = vld [vmem:[%s9 + $0x20] sm:$0xf]
    %v2836 = vld [vmem:[%s9 + $0x24] sm:$0xf]
    %v2837 = vld [vmem:[%s9 + $0x28] sm:$0xf]
    %v2838 = vld [vmem:[%s9 + $0x2c] sm:$0xf]
    %v2839 = vld [vmem:[%s9 + $0x30] sm:$0xf]
    %v2840 = vld [vmem:[%s9 + $0x34] sm:$0xf]
    %v2841 = vld [vmem:[%s9 + $0x38] sm:$0xf]
    %v2842 = vld [vmem:[%s9 + $0x3c] sm:$0xf]
    %v2843 = vld [vmem:[%s10] sm:$0x1]
    %v2845 = vlaneseq
    %v2846 = vshrl.u32 %v2845, 7
    %v2847 = vsub.s32 0, %v2846
    %v2848 = vrot.slane %v2843, %v2847
    %v2866 = vunpack.c.l.b16 %v2827
    %v2867 = vunpack.c.l.b16 %v2828
    %v2868 = vunpack.c.l.b16 %v2829
    %v2869 = vunpack.c.l.b16 %v2830
    %v2870 = vunpack.c.l.b16 %v2831
    %v2871 = vunpack.c.l.b16 %v2832
    %v2872 = vunpack.c.l.b16 %v2833
    %v2873 = vunpack.c.l.b16 %v2834
    %v2874 = vunpack.c.l.b16 %v2835
    %v2875 = vunpack.c.l.b16 %v2836
    %v2876 = vunpack.c.l.b16 %v2837
    %v2877 = vunpack.c.l.b16 %v2838
    %v2878 = vunpack.c.l.b16 %v2839
    %v2879 = vunpack.c.l.b16 %v2840
    %v2880 = vunpack.c.l.b16 %v2841
    %v2881 = vunpack.c.l.b16 %v2842
    %v2882 = vpack.c.b16 %v2867, %v2866
    %v2883 = vpack.c.b16 %v2869, %v2868
    %v2884 = vpack.c.b16 %v2871, %v2870
    %v2885 = vpack.c.b16 %v2873, %v2872
    %v2886 = vpack.c.b16 %v2875, %v2874
    %v2887 = vpack.c.b16 %v2877, %v2876
    %v2888 = vpack.c.b16 %v2879, %v2878
    %v2889 = vpack.c.b16 %v2881, %v2880
    %2898 = vmatprep.subr.bf16.mxu0 0
    %2899 = vmatpush1.bf16.msra.mxu0 %v2882
    %2900 = vmatprep.subr.bf16.mxu0 0
    %2901 = vmatpush1.bf16.msra.mxu0 %v2883
    %2902 = vmatprep.subr.bf16.mxu0 0
    %2903 = vmatpush1.bf16.msra.mxu0 %v2884
    %2904 = vmatprep.subr.bf16.mxu0 0
    %2905 = vmatpush1.bf16.msra.mxu0 %v2885
    %2906 = vmatprep.subr.bf16.mxu0 0
    %2907 = vmatpush1.bf16.msra.mxu0 %v2886
    %2908 = vmatprep.subr.bf16.mxu0 0
    %2909 = vmatpush1.bf16.msra.mxu0 %v2887
    %2910 = vmatprep.subr.bf16.mxu0 0
    %2911 = vmatpush1.bf16.msra.mxu0 %v2888
    %2912 = vmatprep.subr.bf16.mxu0 0
    %2913 = vmatpush1.bf16.msra.mxu0 %v2889
    %2914 = vmatprep.subr.bf16.mxu0 0
    %2915 = vmatpush1.bf16.msra.mxu0 0
    %2916 = vmatprep.subr.bf16.mxu0 0
    %2917 = vmatpush1.bf16.msra.mxu0 0
    %2918 = vmatprep.subr.bf16.mxu0 0
    %2919 = vmatpush1.bf16.msra.mxu0 0
    %2920 = vmatprep.subr.bf16.mxu0 0
    %2921 = vmatpush1.bf16.msra.mxu0 0
    %2922 = vmatprep.subr.bf16.mxu0 0
    %2923 = vmatpush1.bf16.msra.mxu0 0
    %2924 = vmatprep.subr.bf16.mxu0 0
    %2925 = vmatpush1.bf16.msra.mxu0 0
    %2926 = vmatprep.subr.bf16.mxu0 0
    %2927 = vmatpush1.bf16.msra.mxu0 0
    %2928 = vmatprep.subr.bf16.mxu0 0
    %2929 = vmatpush1.bf16.msra.mxu0 0
    %2930 = vmatprep.mubr.bf16.mxu0 0
    %2931 = vmatmul.mubr.bf16.gmra.mrb[0].mxu0 %v2826
    %v2932 = vpop.f32.mrb[0].mxu0
    %v2933 = vadd.f32 %v2848, %v2932
    %v2934 = vpop.f32.mrb[0].mxu0
    %v2935 = vpop.f32.mrb[0].mxu0
    %v2936 = vpop.f32.mrb[0].mxu0
    %2937 = vdwg.mxu0
    %v2938 = vmax.f32 %v2933, 0.0
    %v2939 = vpack.c.bf16 %v2938, %v2938
    %v2940 = vld [vmem:[%s11] sm:$0xf]
    %v2941 = vld [vmem:[%s11 + $0x4] sm:$0xf]
    %v2942 = vld [vmem:[%s11 + $0x8] sm:$0xf]
    %v2943 = vld [vmem:[%s11 + $0xc] sm:$0xf]
    %v2944 = vld [vmem:[%s11 + $0x10] sm:$0xf]
    %v2945 = vld [vmem:[%s11 + $0x14] sm:$0xf]
    %v2946 = vld [vmem:[%s11 + $0x18] sm:$0xf]
    %v2947 = vld [vmem:[%s11 + $0x1c] sm:$0xf]
    %v2948 = vld [vmem:[%s11 + $0x20] sm:$0xf]
    %v2949 = vld [vmem:[%s11 + $0x24] sm:$0xf]
    %v2950 = vld [vmem:[%s11 + $0x28] sm:$0xf]
    %v2951 = vld [vmem:[%s11 + $0x2c] sm:$0xf]
    %v2952 = vld [vmem:[%s11 + $0x30] sm:$0xf]
    %v2953 = vld [vmem:[%s11 + $0x34] sm:$0xf]
    %v2954 = vld [vmem:[%s11 + $0x38] sm:$0xf]
    %v2955 = vld [vmem:[%s11 + $0x3c] sm:$0xf]
    %v2956 = vld [vmem:[%s12] sm:$0x1]
    %v2958 = vlaneseq
    %v2959 = vshrl.u32 %v2958, 7
    %v2960 = vsub.s32 0, %v2959
    %v2961 = vrot.slane %v2956, %v2960
    %v2979 = vunpack.c.l.b16 %v2940
    %v2980 = vunpack.c.l.b16 %v2941
    %v2981 = vunpack.c.l.b16 %v2942
    %v2982 = vunpack.c.l.b16 %v2943
    %v2983 = vunpack.c.l.b16 %v2944
    %v2984 = vunpack.c.l.b16 %v2945
    %v2985 = vunpack.c.l.b16 %v2946
    %v2986 = vunpack.c.l.b16 %v2947
    %v2987 = vunpack.c.l.b16 %v2948
    %v2988 = vunpack.c.l.b16 %v2949
    %v2989 = vunpack.c.l.b16 %v2950
    %v2990 = vunpack.c.l.b16 %v2951
    %v2991 = vunpack.c.l.b16 %v2952
    %v2992 = vunpack.c.l.b16 %v2953
    %v2993 = vunpack.c.l.b16 %v2954
    %v2994 = vunpack.c.l.b16 %v2955
    %v2995 = vpack.c.b16 %v2980, %v2979
    %v2996 = vpack.c.b16 %v2982, %v2981
    %v2997 = vpack.c.b16 %v2984, %v2983
    %v2998 = vpack.c.b16 %v2986, %v2985
    %v2999 = vpack.c.b16 %v2988, %v2987
    %v3000 = vpack.c.b16 %v2990, %v2989
    %v3001 = vpack.c.b16 %v2992, %v2991
    %v3002 = vpack.c.b16 %v2994, %v2993
    %3011 = vmatprep.subr.bf16.mxu0 0
    %3012 = vmatpush1.bf16.msra.mxu0 %v2995
    %3013 = vmatprep.subr.bf16.mxu0 0
    %3014 = vmatpush1.bf16.msra.mxu0 %v2996
    %3015 = vmatprep.subr.bf16.mxu0 0
    %3016 = vmatpush1.bf16.msra.mxu0 %v2997
    %3017 = vmatprep.subr.bf16.mxu0 0
    %3018 = vmatpush1.bf16.msra.mxu0 %v2998
    %3019 = vmatprep.subr.bf16.mxu0 0
    %3020 = vmatpush1.bf16.msra.mxu0 %v2999
    %3021 = vmatprep.subr.bf16.mxu0 0
    %3022 = vmatpush1.bf16.msra.mxu0 %v3000
    %3023 = vmatprep.subr.bf16.mxu0 0
    %3024 = vmatpush1.bf16.msra.mxu0 %v3001
    %3025 = vmatprep.subr.bf16.mxu0 0
    %3026 = vmatpush1.bf16.msra.mxu0 %v3002
    %3027 = vmatprep.subr.bf16.mxu0 0
    %3028 = vmatpush1.bf16.msra.mxu0 0
    %3029 = vmatprep.subr.bf16.mxu0 0
    %3030 = vmatpush1.bf16.msra.mxu0 0
    %3031 = vmatprep.subr.bf16.mxu0 0
    %3032 = vmatpush1.bf16.msra.mxu0 0
    %3033 = vmatprep.subr.bf16.mxu0 0
    %3034 = vmatpush1.bf16.msra.mxu0 0
    %3035 = vmatprep.subr.bf16.mxu0 0
    %3036 = vmatpush1.bf16.msra.mxu0 0
    %3037 = vmatprep.subr.bf16.mxu0 0
    %3038 = vmatpush1.bf16.msra.mxu0 0
    %3039 = vmatprep.subr.bf16.mxu0 0
    %3040 = vmatpush1.bf16.msra.mxu0 0
    %3041 = vmatprep.subr.bf16.mxu0 0
    %3042 = vmatpush1.bf16.msra.mxu0 0
    %3043 = vmatprep.mubr.bf16.mxu0 0
    %3044 = vmatmul.mubr.bf16.gmra.mrb[0].mxu0 %v2939
    %v3045 = vpop.f32.mrb[0].mxu0
    %v3046 = vadd.f32 %v2961, %v3045
    %v3047 = vpop.f32.mrb[0].mxu0
    %v3048 = vpop.f32.mrb[0].mxu0
    %v3049 = vpop.f32.mrb[0].mxu0
    %3050 = vdwg.mxu0
    %3051 = vst [vmem:[#allocation2] sm:$0x3] %v3046
    // Predicated region
    $region54: #{net_forward.1} parent=1 // pred_check
      _
    $region55: #{net_forward.1} parent=1 // pred_check_branch
      %3053 = sbr.rel (0) target = $region57
    $region56: #{net_forward.1} parent=1 // pred_region
      %s3055 = ssub.s32 32, 32
      %3056 = vsyncadd [#allocation3], %s3055
      %s3058 = sshll.u32 [#allocation2], 4
      %s3059 = int_to_ptr.vmem [resolvable:$true] %s3058
      %3061 = dma.vmem_to_hbm [thread:$0]  %s3059, 32, %s13, [#allocation3]
    $region57: #{net_forward.1} parent=1 // pred_fallthru
      _
    // Predicated region
    $region58: #{net_forward.1} parent=1 // pred_check
      _
    $region59: #{net_forward.1} parent=1 // pred_check_branch
      %3063 = sbr.rel (0) target = $region61
    $region60: #{net_forward.1} parent=1 // pred_region
      %3064 = dma.done [#allocation3], 32
    $region61: #{net_forward.1} parent=1 // pred_fallthru
      _
    %3065 = vsyncpa [#allocation3], 1

</llo_original>
